<compile_context>
chip_gen: v6e
topology: v6e:2x2x1
jax: 0.10.0
libtpu: 0.0.40
codegen_flags: <defaults>
</compile_context>

<pallas_src>
import functools

import jax
import jax.numpy as jnp
from jax.experimental import pallas as pl
from jax.experimental.pallas import tpu as pltpu


# ---------------------------------------------------------------------------
# Kernel body (shared by the two variants)
# ---------------------------------------------------------------------------
def _attn_proj_body(xq_ref, xkv_ref, wq_ref, wk_ref, wv_ref,
                    bq_ref, bk_ref, bv_ref, wp_ref, bp_ref,
                    out_ref, attn_ref, acc_ref, *, heads_per_block, head_dim):
    """Fused q/k/v projection + softmax attention + output projection.

    Grid: (batch, q_tile, head_block); head_block is the innermost
    ("arbitrary") axis used as the reduction axis for the fused projection.

    xq_ref  : (1, tq, C)        q-row tile of hidden states
    xkv_ref : (1, S, C)         full-sequence hidden states (k/v source)
    w*_ref  : (1, C, hb*D)      per-head-block projection weights (scale folded
                                into wq/bq in the wrapper)
    b*_ref  : (1, 1, hb*D)
    wp_ref  : (1, hb*D, C)      rows of proj.weight^T for this head block
    bp_ref  : (1, C)
    out_ref : (1, tq, C)        final projected output (accumulated over head
                                blocks, written on the last head block)
    attn_ref: (1, hb, tq, S)    attention probabilities (or None)
    acc_ref : (tq, C) f32       VMEM accumulator for the fused projection
    """
    h_idx = pl.program_id(2)
    n_h = pl.num_programs(2)

    @pl.when(h_idx == 0)
    def _init():
        acc_ref[...] = jnp.zeros_like(acc_ref)

    xq = xq_ref[0]                       # (tq, C)
    xkv = xkv_ref[0]                     # (S, C)

    # Projections for this head block (N = hb*D lanes on the MXU).
    q = jnp.dot(xq, wq_ref[0], preferred_element_type=jnp.float32) + bq_ref[0]
    k = jnp.dot(xkv, wk_ref[0], preferred_element_type=jnp.float32) + bk_ref[0]
    v = jnp.dot(xkv, wv_ref[0], preferred_element_type=jnp.float32) + bv_ref[0]

    o_parts = []
    for i in range(heads_per_block):
        sl = slice(i * head_dim, (i + 1) * head_dim)
        q_h = q[:, sl]                   # (tq, D)
        k_h = k[:, sl]                   # (S, D)
        v_h = v[:, sl]                   # (S, D)

        # scores = q_h @ k_h^T without materializing the transpose.
        s = jax.lax.dot_general(q_h, k_h, (((1,), (1,)), ((), ())),
                                preferred_element_type=jnp.float32)   # (tq, S)
        s = s - jnp.max(s, axis=-1, keepdims=True)
        e = jnp.exp(s)
        inv = pl.reciprocal(jnp.sum(e, axis=-1, keepdims=True))       # (tq, 1)

        if attn_ref is None:
            # Defer normalization to the (tq, D) output: S*D mults vs S*S.
            o_h = jnp.dot(e.astype(v_h.dtype), v_h,
                          preferred_element_type=jnp.float32) * inv
        else:
            p = e * inv
            attn_ref[0, i] = p.astype(attn_ref.dtype)
            # TODO(synk): nn.functional.dropout is a no-op (eval mode).
            o_h = jnp.dot(p.astype(v_h.dtype), v_h,
                          preferred_element_type=jnp.float32)
        o_parts.append(o_h)

    o_blk = o_parts[0] if len(o_parts) == 1 else jnp.concatenate(o_parts, -1)

    # Fused output projection: accumulate this head block's contribution.
    wp = wp_ref[0]                                        # (hb*D, C)
    acc_ref[...] += jnp.dot(o_blk.astype(wp.dtype), wp,
                            preferred_element_type=jnp.float32)

    @pl.when(h_idx == n_h - 1)
    def _finalize():
        out_ref[0] = (acc_ref[...] + bp_ref[...]).astype(out_ref.dtype)


def _kernel_with_attn(xq_ref, xkv_ref, wq_ref, wk_ref, wv_ref,
                      bq_ref, bk_ref, bv_ref, wp_ref, bp_ref,
                      out_ref, attn_ref, acc_ref, *, heads_per_block, head_dim):
    _attn_proj_body(xq_ref, xkv_ref, wq_ref, wk_ref, wv_ref,
                    bq_ref, bk_ref, bv_ref, wp_ref, bp_ref,
                    out_ref, attn_ref, acc_ref,
                    heads_per_block=heads_per_block, head_dim=head_dim)


def _kernel_no_attn(xq_ref, xkv_ref, wq_ref, wk_ref, wv_ref,
                    bq_ref, bk_ref, bv_ref, wp_ref, bp_ref,
                    out_ref, acc_ref, *, heads_per_block, head_dim):
    _attn_proj_body(xq_ref, xkv_ref, wq_ref, wk_ref, wv_ref,
                    bq_ref, bk_ref, bv_ref, wp_ref, bp_ref,
                    out_ref, None, acc_ref,
                    heads_per_block=heads_per_block, head_dim=head_dim)


# ---------------------------------------------------------------------------
# Tiling heuristics
# ---------------------------------------------------------------------------
def _pick_q_tile(seq_len, target):
    if seq_len <= target:
        return seq_len
    for cand in range(min(target, seq_len), 0, -1):
        if seq_len % cand == 0 and cand % 8 == 0:
            return cand
    for cand in range(min(target, seq_len), 0, -1):
        if seq_len % cand == 0:
            return cand
    return seq_len


def _pick_head_block(num_heads, head_dim, lane_target=128):
    # Smallest head group whose concatenated head_dim fills >=128 lanes.
    for cand in range(1, num_heads + 1):
        if num_heads % cand == 0 and cand * head_dim >= lane_target:
            return cand
    return num_heads


# ---------------------------------------------------------------------------
# Wrapper (mirrors SamVisionAttentionSplit.forward, eval mode)
# ---------------------------------------------------------------------------
def sam_vision_attention_split(hidden_states, params, num_heads,
                               output_attentions=False,
                               q_tile_target=512, head_block=None):
    B, H, W, C = hidden_states.shape
    S = H * W
    D = C // num_heads
    scale = D ** -0.5
    x = hidden_states.reshape(B, S, C)

    hb = _pick_head_block(num_heads, D) if head_block is None else head_block
    assert num_heads % hb == 0
    n_hb = num_heads // hb
    tq = _pick_q_tile(S, q_tile_target)
    n_q = S // tq

    # torch nn.Linear: y = x @ W.T + b, W of shape (out, in). Output channels
    # are split head-major: channel = head * D + d, so head block h covers
    # columns [h*hb*D, (h+1)*hb*D).
    def split_heads(w_torch, b_torch, weight_scale=None):
        w = jnp.transpose(w_torch)                              # (C_in, C_out)
        b = b_torch
        if weight_scale is not None:                            # fold softmax scale
            w = w * weight_scale
            b = b * weight_scale
        w = jnp.transpose(w.reshape(C, n_hb, hb * D), (1, 0, 2))  # (n_hb, C, hb*D)
        b = b.reshape(n_hb, 1, hb * D)
        return w, b

    wq, bq = split_heads(params["wq"], params["bq"], scale)
    wk, bk = split_heads(params["wk"], params["bk"])
    wv, bv = split_heads(params["wv"], params["bv"])
    wp = jnp.transpose(params["wp"]).reshape(n_hb, hb * D, C)   # (n_hb, hb*D, C)
    bp = params["bp"].reshape(1, C)

    in_specs = [
        pl.BlockSpec((1, tq, C), lambda b, qi, h: (b, qi, 0)),      # x (q rows)
        pl.BlockSpec((1, S, C), lambda b, qi, h: (b, 0, 0)),        # x (k/v src)
        pl.BlockSpec((1, C, hb * D), lambda b, qi, h: (h, 0, 0)),   # wq
        pl.BlockSpec((1, C, hb * D), lambda b, qi, h: (h, 0, 0)),   # wk
        pl.BlockSpec((1, C, hb * D), lambda b, qi, h: (h, 0, 0)),   # wv
        pl.BlockSpec((1, 1, hb * D), lambda b, qi, h: (h, 0, 0)),   # bq
        pl.BlockSpec((1, 1, hb * D), lambda b, qi, h: (h, 0, 0)),   # bk
        pl.BlockSpec((1, 1, hb * D), lambda b, qi, h: (h, 0, 0)),   # bv
        pl.BlockSpec((1, hb * D, C), lambda b, qi, h: (h, 0, 0)),   # wp block
        pl.BlockSpec((1, C), lambda b, qi, h: (0, 0)),              # bp
    ]
    out_spec_y = pl.BlockSpec((1, tq, C), lambda b, qi, h: (b, qi, 0))
    scratch = [pltpu.VMEM((tq, C), jnp.float32)]

    compiler_params = pltpu.CompilerParams(
        dimension_semantics=("parallel", "parallel", "arbitrary"),
        vmem_limit_bytes=64 * 1024 * 1024)

    itemsize = jnp.dtype(x.dtype).itemsize
    flops = (2 * B * S * C * C                    # q projection
             + 2 * 2 * B * n_q * S * C * C        # k/v projections (per q tile)
             + 4 * B * num_heads * S * S * D      # scores + probs @ v
             + 2 * B * S * C * C)                 # fused output projection
    transcendentals = B * num_heads * S * S
    bytes_accessed = itemsize * (B * S * C * (2 + n_q) + 4 * C * C + 4 * C)
    if output_attentions:
        bytes_accessed += itemsize * B * num_heads * S * S
    cost = pl.CostEstimate(flops=flops, transcendentals=transcendentals,
                           bytes_accessed=bytes_accessed)

    grid = (B, n_q, n_hb)
    args = (x, x, wq, wk, wv, bq, bk, bv, wp, bp)

    if output_attentions:
        out_y, attn_w = pl.pallas_call(
            functools.partial(_kernel_with_attn, heads_per_block=hb, head_dim=D),
            out_shape=(jax.ShapeDtypeStruct((B, S, C), x.dtype),
                       jax.ShapeDtypeStruct((B, num_heads, S, S), x.dtype)),
            grid=grid,
            in_specs=in_specs,
            out_specs=(out_spec_y,
                       pl.BlockSpec((1, hb, tq, S),
                                    lambda b, qi, h: (b, h, qi, 0))),
            scratch_shapes=scratch,
            compiler_params=compiler_params,
            cost_estimate=cost,
        )(*args)
        return (out_y.reshape(B, H, W, C),
                attn_w.reshape(B * num_heads, S, S))

    out_y = pl.pallas_call(
        functools.partial(_kernel_no_attn, heads_per_block=hb, head_dim=D),
        out_shape=jax.ShapeDtypeStruct((B, S, C), x.dtype),
        grid=grid,
        in_specs=in_specs,
        out_specs=out_spec_y,
        scratch_shapes=scratch,
        compiler_params=compiler_params,
        cost_estimate=cost,
    )(*args)
    return out_y.reshape(B, H, W, C), None


# ---------------------------------------------------------------------------
# Pure-JAX reference (for correctness check)
# ---------------------------------------------------------------------------
def _reference(hidden_states, params, num_heads):
    B, H, W, C = hidden_states.shape
    S, D = H * W, C // num_heads
    scale = D ** -0.5
    x = hidden_states.reshape(B, S, C)

    def lin(a, w, b):
        return a @ w.T + b

    def heads(y):
        return (y.reshape(B, S, num_heads, D).transpose(0, 2, 1, 3)
                 .reshape(B * num_heads, S, D))

    q = heads(lin(x, params["wq"], params["bq"]))
    k = heads(lin(x, params["wk"], params["bk"]))
    v = heads(lin(x, params["wv"], params["bv"]))
    aw = jax.nn.softmax((q * scale) @ k.transpose(0, 2, 1), axis=-1)
    out = (aw @ v).reshape(B, num_heads, H, W, D).transpose(0, 2, 3, 1, 4)
    out = out.reshape(B, H, W, C)
    return lin(out, params["wp"], params["bp"]), aw


def _make_params(key, hidden_size):
    ks = jax.random.split(key, 8)
    init = lambda k, shape: (0.02 * jax.random.normal(k, shape)).astype(jnp.float32)
    return {
        "wq": init(ks[0], (hidden_size, hidden_size)),
        "bq": init(ks[1], (hidden_size,)),
        "wk": init(ks[2], (hidden_size, hidden_size)),
        "bk": init(ks[3], (hidden_size,)),
        "wv": init(ks[4], (hidden_size, hidden_size)),
        "bv": init(ks[5], (hidden_size,)),
        "wp": init(ks[6], (hidden_size, hidden_size)),
        "bp": init(ks[7], (hidden_size,)),
    }


# ---------------------------------------------------------------------------
if __name__ == "__main__":
    key = jax.random.PRNGKey(0)
    k_params, k_x, k_params2, k_x2 = jax.random.split(key, 4)

    # --- Test 1: output_attentions=True, single q tile / head block --------
    B, H, W = 2, 8, 8
    hidden_size, num_heads = 32, 2
    params = _make_params(k_params, hidden_size)
    hidden_states = jax.random.normal(k_x, (B, H, W, hidden_size), jnp.float32)

    out, attn_w = sam_vision_attention_split(
        hidden_states, params, num_heads, output_attentions=True)
    out = jax.block_until_ready(out)
    attn_w = jax.block_until_ready(attn_w)

    ref_out, ref_attn = _reference(hidden_states, params, num_heads)
    assert out.shape == (B, H, W, hidden_size)
    assert attn_w.shape == (B * num_heads, H * W, H * W)
    assert jnp.allclose(out, ref_out, atol=1e-4, rtol=1e-4)
    assert jnp.allclose(attn_w, ref_attn, atol=1e-4, rtol=1e-4)

    # --- Test 2: output_attentions=False, multiple q tiles + head blocks ---
    B2, H2, W2 = 1, 16, 16
    hidden_size2, num_heads2 = 32, 4
    params2 = _make_params(k_params2, hidden_size2)
    hidden_states2 = jax.random.normal(k_x2, (B2, H2, W2, hidden_size2),
                                       jnp.float32)

    out2, none2 = sam_vision_attention_split(
        hidden_states2, params2, num_heads2, output_attentions=False,
        q_tile_target=128, head_block=2)   # forces n_q=2, n_hb=2 accumulation
    out2 = jax.block_until_ready(out2)

    ref_out2, _ = _reference(hidden_states2, params2, num_heads2)
    assert none2 is None
    assert out2.shape == (B2, H2, W2, hidden_size2)
    assert jnp.allclose(out2, ref_out2, atol=1e-4, rtol=1e-4)

    print("KERNEL_OK")
</pallas_src>

<mosaic_0001>
module attributes {stable_mosaic.version = 11 : i64} {
  func.func @_kernel_with_attn(%arg0: i32, %arg1: i32, %arg2: i32, %arg3: memref<1x64x32xf32, #tpu.memory_space<vmem>>, %arg4: memref<1x64x32xf32, #tpu.memory_space<vmem>>, %arg5: memref<1x32x32xf32, #tpu.memory_space<vmem>>, %arg6: memref<1x32x32xf32, #tpu.memory_space<vmem>>, %arg7: memref<1x32x32xf32, #tpu.memory_space<vmem>>, %arg8: memref<1x1x32xf32, #tpu.memory_space<vmem>>, %arg9: memref<1x1x32xf32, #tpu.memory_space<vmem>>, %arg10: memref<1x1x32xf32, #tpu.memory_space<vmem>>, %arg11: memref<1x32x32xf32, #tpu.memory_space<vmem>>, %arg12: memref<1x32xf32, #tpu.memory_space<vmem>>, %arg13: memref<1x64x32xf32, #tpu.memory_space<vmem>>, %arg14: memref<1x2x64x64xf32, #tpu.memory_space<vmem>>, %arg15: memref<64x32xf32, #tpu.memory_space<vmem>>) attributes {dimension_semantics = [#tpu.dimension_semantics<parallel>, #tpu.dimension_semantics<parallel>, #tpu.dimension_semantics<arbitrary>], iteration_bounds = array<i64: 2, 1, 1>, scalar_prefetch = 0 : i64, scratch_operands = 1 : i64, tpu.core_type = #tpu.core_type<tc>, window_params = [{transform_indices = @transform_0, window_bounds = array<i64: 1, 64, 32>}, {transform_indices = @transform_1, window_bounds = array<i64: 1, 64, 32>}, {transform_indices = @transform_2, window_bounds = array<i64: 1, 32, 32>}, {transform_indices = @transform_3, window_bounds = array<i64: 1, 32, 32>}, {transform_indices = @transform_4, window_bounds = array<i64: 1, 32, 32>}, {transform_indices = @transform_5, window_bounds = array<i64: 1, 1, 32>}, {transform_indices = @transform_6, window_bounds = array<i64: 1, 1, 32>}, {transform_indices = @transform_7, window_bounds = array<i64: 1, 1, 32>}, {transform_indices = @transform_8, window_bounds = array<i64: 1, 32, 32>}, {pipeline_mode = #tpu.pipeline_mode<synchronous>, transform_indices = @transform_9, window_bounds = array<i64: 1, 32>}, {transform_indices = @transform_10, window_bounds = array<i64: 1, 64, 32>}, {transform_indices = @transform_11, window_bounds = array<i64: 1, 2, 64, 64>}]} {
    %c0_i32 = arith.constant 0 : i32
    %0 = arith.cmpi eq, %arg2, %c0_i32 : i32
    %1 = arith.extui %0 : i1 to i32
    %c0_i32_0 = arith.constant 0 : i32
    %2 = arith.cmpi ne, %1, %c0_i32_0 : i32
    scf.if %2 {
      %cst_51 = arith.constant 0.000000e+00 : f32
      %74 = vector.broadcast %cst_51 : f32 to vector<64x32xf32>
      %c0_52 = arith.constant 0 : index
      %c0_53 = arith.constant 0 : index
      %75 = vector.load %arg15[%c0_52, %c0_53] : memref<64x32xf32, #tpu.memory_space<vmem>>, vector<64x32xf32>
      tpu.vector_store %arg15[%c0_52, %c0_53], %74 {strides = array<i32>} : memref<64x32xf32, #tpu.memory_space<vmem>>, vector<64x32xf32>,
    } else {
    }
    %c0 = arith.constant 0 : index
    %c0_1 = arith.constant 0 : index
    %c0_2 = arith.constant 0 : index
    %3 = vector.load %arg3[%c0, %c0_1, %c0_2] : memref<1x64x32xf32, #tpu.memory_space<vmem>>, vector<1x64x32xf32>
    %4 = vector.shape_cast %3 : vector<1x64x32xf32> to vector<64x32xf32>
    %c0_3 = arith.constant 0 : index
    %c0_4 = arith.constant 0 : index
    %c0_5 = arith.constant 0 : index
    %5 = vector.load %arg4[%c0_3, %c0_4, %c0_5] : memref<1x64x32xf32, #tpu.memory_space<vmem>>, vector<1x64x32xf32>
    %6 = vector.shape_cast %5 : vector<1x64x32xf32> to vector<64x32xf32>
    %c0_6 = arith.constant 0 : index
    %c0_7 = arith.constant 0 : index
    %c0_8 = arith.constant 0 : index
    %7 = vector.load %arg5[%c0_6, %c0_7, %c0_8] : memref<1x32x32xf32, #tpu.memory_space<vmem>>, vector<1x32x32xf32>
    %8 = vector.shape_cast %7 : vector<1x32x32xf32> to vector<32x32xf32>
    %cst = arith.constant dense<0.000000e+00> : vector<64x32xf32>
    %9 = tpu.matmul %4, %8, %cst {dimension_numbers = #tpu.dot_dimension_numbers<[1], [0], [0], [1], [0, 0, 1, 1], [], []>} : vector<64x32xf32>, vector<32x32xf32>, vector<64x32xf32> -> vector<64x32xf32>
    %c0_9 = arith.constant 0 : index
    %c0_10 = arith.constant 0 : index
    %c0_11 = arith.constant 0 : index
    %10 = vector.load %arg8[%c0_9, %c0_10, %c0_11] : memref<1x1x32xf32, #tpu.memory_space<vmem>>, vector<1x1x32xf32>
    %11 = vector.shape_cast %10 : vector<1x1x32xf32> to vector<1x32xf32>
    %12 = vector.broadcast %11 : vector<1x32xf32> to vector<64x32xf32>
    %13 = arith.addf %9, %12 : vector<64x32xf32>
    %c0_12 = arith.constant 0 : index
    %c0_13 = arith.constant 0 : index
    %c0_14 = arith.constant 0 : index
    %14 = vector.load %arg6[%c0_12, %c0_13, %c0_14] : memref<1x32x32xf32, #tpu.memory_space<vmem>>, vector<1x32x32xf32>
    %15 = vector.shape_cast %14 : vector<1x32x32xf32> to vector<32x32xf32>
    %cst_15 = arith.constant dense<0.000000e+00> : vector<64x32xf32>
    %16 = tpu.matmul %6, %15, %cst_15 {dimension_numbers = #tpu.dot_dimension_numbers<[1], [0], [0], [1], [0, 0, 1, 1], [], []>} : vector<64x32xf32>, vector<32x32xf32>, vector<64x32xf32> -> vector<64x32xf32>
    %c0_16 = arith.constant 0 : index
    %c0_17 = arith.constant 0 : index
    %c0_18 = arith.constant 0 : index
    %17 = vector.load %arg9[%c0_16, %c0_17, %c0_18] : memref<1x1x32xf32, #tpu.memory_space<vmem>>, vector<1x1x32xf32>
    %18 = vector.shape_cast %17 : vector<1x1x32xf32> to vector<1x32xf32>
    %19 = vector.broadcast %18 : vector<1x32xf32> to vector<64x32xf32>
    %20 = arith.addf %16, %19 : vector<64x32xf32>
    %c0_19 = arith.constant 0 : index
    %c0_20 = arith.constant 0 : index
    %c0_21 = arith.constant 0 : index
    %21 = vector.load %arg7[%c0_19, %c0_20, %c0_21] : memref<1x32x32xf32, #tpu.memory_space<vmem>>, vector<1x32x32xf32>
    %22 = vector.shape_cast %21 : vector<1x32x32xf32> to vector<32x32xf32>
    %cst_22 = arith.constant dense<0.000000e+00> : vector<64x32xf32>
    %23 = tpu.matmul %6, %22, %cst_22 {dimension_numbers = #tpu.dot_dimension_numbers<[1], [0], [0], [1], [0, 0, 1, 1], [], []>} : vector<64x32xf32>, vector<32x32xf32>, vector<64x32xf32> -> vector<64x32xf32>
    %c0_23 = arith.constant 0 : index
    %c0_24 = arith.constant 0 : index
    %c0_25 = arith.constant 0 : index
    %24 = vector.load %arg10[%c0_23, %c0_24, %c0_25] : memref<1x1x32xf32, #tpu.memory_space<vmem>>, vector<1x1x32xf32>
    %25 = vector.shape_cast %24 : vector<1x1x32xf32> to vector<1x32xf32>
    %26 = vector.broadcast %25 : vector<1x32xf32> to vector<64x32xf32>
    %27 = arith.addf %23, %26 : vector<64x32xf32>
    %28 = vector.extract_strided_slice %13 {offsets = [0, 0], sizes = [64, 16], strides = [1, 1]} : vector<64x32xf32> to vector<64x16xf32>
    %29 = vector.extract_strided_slice %20 {offsets = [0, 0], sizes = [64, 16], strides = [1, 1]} : vector<64x32xf32> to vector<64x16xf32>
    %30 = vector.extract_strided_slice %27 {offsets = [0, 0], sizes = [64, 16], strides = [1, 1]} : vector<64x32xf32> to vector<64x16xf32>
    %cst_26 = arith.constant dense<0.000000e+00> : vector<64x64xf32>
    %31 = tpu.matmul %28, %29, %cst_26 {dimension_numbers = #tpu.dot_dimension_numbers<[1], [1], [0], [0], [0, 0, 1, 0], [], []>} : vector<64x16xf32>, vector<64x16xf32>, vector<64x64xf32> -> vector<64x64xf32>
    %cst_27 = arith.constant dense<0xFF800000> : vector<64xf32>
    %32 = vector.multi_reduction <maximumf>, %31, %cst_27 [1] : vector<64x64xf32> to vector<64xf32>
    %33 = vector.shape_cast %32 : vector<64xf32> to vector<64x1xf32>
    %34 = vector.broadcast %33 : vector<64x1xf32> to vector<64x64xf32>
    %35 = arith.subf %31, %34 : vector<64x64xf32>
    %36 = math.exp %35 : vector<64x64xf32>
    %cst_28 = arith.constant dense<0.000000e+00> : vector<64xf32>
    %37 = vector.multi_reduction <add>, %36, %cst_28 [1] : vector<64x64xf32> to vector<64xf32>
    %38 = vector.shape_cast %37 : vector<64xf32> to vector<64x1xf32>
    %39 = tpu.reciprocal %38 : vector<64x1xf32> -> vector<64x1xf32>
    %40 = vector.broadcast %39 : vector<64x1xf32> to vector<64x64xf32>
    %41 = arith.mulf %36, %40 : vector<64x64xf32>
    %c0_29 = arith.constant 0 : index
    %c0_30 = arith.constant 0 : index
    %c0_31 = arith.constant 0 : index
    %c0_32 = arith.constant 0 : index
    %42 = vector.load %arg14[%c0_29, %c0_30, %c0_31, %c0_32] : memref<1x2x64x64xf32, #tpu.memory_space<vmem>>, vector<1x1x64x64xf32>
    %43 = vector.shape_cast %42 : vector<1x1x64x64xf32> to vector<64x64xf32>
    %44 = vector.shape_cast %41 : vector<64x64xf32> to vector<1x1x64x64xf32>
    tpu.vector_store %arg14[%c0_29, %c0_30, %c0_31, %c0_32], %44 {strides = array<i32>} : memref<1x2x64x64xf32, #tpu.memory_space<vmem>>, vector<1x1x64x64xf32>,
    %cst_33 = arith.constant dense<0.000000e+00> : vector<64x16xf32>
    %45 = tpu.matmul %41, %30, %cst_33 {dimension_numbers = #tpu.dot_dimension_numbers<[1], [0], [0], [1], [0, 0, 1, 1], [], []>} : vector<64x64xf32>, vector<64x16xf32>, vector<64x16xf32> -> vector<64x16xf32>
    %46 = vector.extract_strided_slice %13 {offsets = [0, 16], sizes = [64, 16], strides = [1, 1]} : vector<64x32xf32> to vector<64x16xf32>
    %47 = vector.extract_strided_slice %20 {offsets = [0, 16], sizes = [64, 16], strides = [1, 1]} : vector<64x32xf32> to vector<64x16xf32>
    %48 = vector.extract_strided_slice %27 {offsets = [0, 16], sizes = [64, 16], strides = [1, 1]} : vector<64x32xf32> to vector<64x16xf32>
    %cst_34 = arith.constant dense<0.000000e+00> : vector<64x64xf32>
    %49 = tpu.matmul %46, %47, %cst_34 {dimension_numbers = #tpu.dot_dimension_numbers<[1], [1], [0], [0], [0, 0, 1, 0], [], []>} : vector<64x16xf32>, vector<64x16xf32>, vector<64x64xf32> -> vector<64x64xf32>
    %cst_35 = arith.constant dense<0xFF800000> : vector<64xf32>
    %50 = vector.multi_reduction <maximumf>, %49, %cst_35 [1] : vector<64x64xf32> to vector<64xf32>
    %51 = vector.shape_cast %50 : vector<64xf32> to vector<64x1xf32>
    %52 = vector.broadcast %51 : vector<64x1xf32> to vector<64x64xf32>
    %53 = arith.subf %49, %52 : vector<64x64xf32>
    %54 = math.exp %53 : vector<64x64xf32>
    %cst_36 = arith.constant dense<0.000000e+00> : vector<64xf32>
    %55 = vector.multi_reduction <add>, %54, %cst_36 [1] : vector<64x64xf32> to vector<64xf32>
    %56 = vector.shape_cast %55 : vector<64xf32> to vector<64x1xf32>
    %57 = tpu.reciprocal %56 : vector<64x1xf32> -> vector<64x1xf32>
    %58 = vector.broadcast %57 : vector<64x1xf32> to vector<64x64xf32>
    %59 = arith.mulf %54, %58 : vector<64x64xf32>
    %c0_37 = arith.constant 0 : index
    %c1 = arith.constant 1 : index
    %c0_38 = arith.constant 0 : index
    %c0_39 = arith.constant 0 : index
    %60 = vector.load %arg14[%c0_37, %c1, %c0_38, %c0_39] : memref<1x2x64x64xf32, #tpu.memory_space<vmem>>, vector<1x1x64x64xf32>
    %61 = vector.shape_cast %60 : vector<1x1x64x64xf32> to vector<64x64xf32>
    %62 = vector.shape_cast %59 : vector<64x64xf32> to vector<1x1x64x64xf32>
    tpu.vector_store %arg14[%c0_37, %c1, %c0_38, %c0_39], %62 {strides = array<i32>} : memref<1x2x64x64xf32, #tpu.memory_space<vmem>>, vector<1x1x64x64xf32>,
    %cst_40 = arith.constant dense<0.000000e+00> : vector<64x16xf32>
    %63 = tpu.matmul %59, %48, %cst_40 {dimension_numbers = #tpu.dot_dimension_numbers<[1], [0], [0], [1], [0, 0, 1, 1], [], []>} : vector<64x64xf32>, vector<64x16xf32>, vector<64x16xf32> -> vector<64x16xf32>
    %64 = tpu.concatenate %45, %63 in 1 : vector<64x16xf32>, vector<64x16xf32> -> vector<64x32xf32>
    %c0_41 = arith.constant 0 : index
    %c0_42 = arith.constant 0 : index
    %c0_43 = arith.constant 0 : index
    %65 = vector.load %arg11[%c0_41, %c0_42, %c0_43] : memref<1x32x32xf32, #tpu.memory_space<vmem>>, vector<1x32x32xf32>
    %66 = vector.shape_cast %65 : vector<1x32x32xf32> to vector<32x32xf32>
    %c0_44 = arith.constant 0 : index
    %c0_45 = arith.constant 0 : index
    %67 = vector.load %arg15[%c0_44, %c0_45] : memref<64x32xf32, #tpu.memory_space<vmem>>, vector<64x32xf32>
    %cst_46 = arith.constant dense<0.000000e+00> : vector<64x32xf32>
    %68 = tpu.matmul %64, %66, %cst_46 {dimension_numbers = #tpu.dot_dimension_numbers<[1], [0], [0], [1], [0, 0, 1, 1], [], []>} : vector<64x32xf32>, vector<32x32xf32>, vector<64x32xf32> -> vector<64x32xf32>
    %69 = arith.addf %67, %68 : vector<64x32xf32>
    %c0_47 = arith.constant 0 : index
    %c0_48 = arith.constant 0 : index
    %70 = vector.load %arg15[%c0_47, %c0_48] : memref<64x32xf32, #tpu.memory_space<vmem>>, vector<64x32xf32>
    tpu.vector_store %arg15[%c0_47, %c0_48], %69 {strides = array<i32>} : memref<64x32xf32, #tpu.memory_space<vmem>>, vector<64x32xf32>,
    %c0_i32_49 = arith.constant 0 : i32
    %71 = arith.cmpi eq, %arg2, %c0_i32_49 : i32
    %72 = arith.extui %71 : i1 to i32
    %c0_i32_50 = arith.constant 0 : i32
    %73 = arith.cmpi ne, %72, %c0_i32_50 : i32
    scf.if %73 {
      %c0_51 = arith.constant 0 : index
      %c0_52 = arith.constant 0 : index
      %74 = vector.load %arg15[%c0_51, %c0_52] : memref<64x32xf32, #tpu.memory_space<vmem>>, vector<64x32xf32>
      %c0_53 = arith.constant 0 : index
      %c0_54 = arith.constant 0 : index
      %75 = vector.load %arg12[%c0_53, %c0_54] : memref<1x32xf32, #tpu.memory_space<vmem>>, vector<1x32xf32>
      %76 = vector.broadcast %75 : vector<1x32xf32> to vector<64x32xf32>
      %77 = arith.addf %74, %76 : vector<64x32xf32>
      %c0_55 = arith.constant 0 : index
      %c0_56 = arith.constant 0 : index
      %c0_57 = arith.constant 0 : index
      %78 = vector.load %arg13[%c0_55, %c0_56, %c0_57] : memref<1x64x32xf32, #tpu.memory_space<vmem>>, vector<1x64x32xf32>
      %79 = vector.shape_cast %78 : vector<1x64x32xf32> to vector<64x32xf32>
      %80 = vector.shape_cast %77 : vector<64x32xf32> to vector<1x64x32xf32>
      tpu.vector_store %arg13[%c0_55, %c0_56, %c0_57], %80 {strides = array<i32>} : memref<1x64x32xf32, #tpu.memory_space<vmem>>, vector<1x64x32xf32>,
    } else {
    }
    return
  }
  func.func @transform_0(%arg0: i32, %arg1: i32, %arg2: i32) -> (i32, i32, i32) {
    %c0_i32 = arith.constant 0 : i32
    %c0_i32_0 = arith.constant 0 : i32
    return %arg0, %arg1, %c0_i32 : i32, i32, i32
  }
  func.func @transform_1(%arg0: i32, %arg1: i32, %arg2: i32) -> (i32, i32, i32) {
    %c0_i32 = arith.constant 0 : i32
    %c0_i32_0 = arith.constant 0 : i32
    %c0_i32_1 = arith.constant 0 : i32
    return %arg0, %c0_i32, %c0_i32_0 : i32, i32, i32
  }
  func.func @transform_2(%arg0: i32, %arg1: i32, %arg2: i32) -> (i32, i32, i32) {
    %c0_i32 = arith.constant 0 : i32
    %c0_i32_0 = arith.constant 0 : i32
    %c0_i32_1 = arith.constant 0 : i32
    return %arg2, %c0_i32, %c0_i32_0 : i32, i32, i32
  }
  func.func @transform_3(%arg0: i32, %arg1: i32, %arg2: i32) -> (i32, i32, i32) {
    %c0_i32 = arith.constant 0 : i32
    %c0_i32_0 = arith.constant 0 : i32
    %c0_i32_1 = arith.constant 0 : i32
    return %arg2, %c0_i32, %c0_i32_0 : i32, i32, i32
  }
  func.func @transform_4(%arg0: i32, %arg1: i32, %arg2: i32) -> (i32, i32, i32) {
    %c0_i32 = arith.constant 0 : i32
    %c0_i32_0 = arith.constant 0 : i32
    %c0_i32_1 = arith.constant 0 : i32
    return %arg2, %c0_i32, %c0_i32_0 : i32, i32, i32
  }
  func.func @transform_5(%arg0: i32, %arg1: i32, %arg2: i32) -> (i32, i32, i32) {
    %c0_i32 = arith.constant 0 : i32
    %c0_i32_0 = arith.constant 0 : i32
    %c0_i32_1 = arith.constant 0 : i32
    return %arg2, %c0_i32, %c0_i32_0 : i32, i32, i32
  }
  func.func @transform_6(%arg0: i32, %arg1: i32, %arg2: i32) -> (i32, i32, i32) {
    %c0_i32 = arith.constant 0 : i32
    %c0_i32_0 = arith.constant 0 : i32
    %c0_i32_1 = arith.constant 0 : i32
    return %arg2, %c0_i32, %c0_i32_0 : i32, i32, i32
  }
  func.func @transform_7(%arg0: i32, %arg1: i32, %arg2: i32) -> (i32, i32, i32) {
    %c0_i32 = arith.constant 0 : i32
    %c0_i32_0 = arith.constant 0 : i32
    %c0_i32_1 = arith.constant 0 : i32
    return %arg2, %c0_i32, %c0_i32_0 : i32, i32, i32
  }
  func.func @transform_8(%arg0: i32, %arg1: i32, %arg2: i32) -> (i32, i32, i32) {
    %c0_i32 = arith.constant 0 : i32
    %c0_i32_0 = arith.constant 0 : i32
    %c0_i32_1 = arith.constant 0 : i32
    return %arg2, %c0_i32, %c0_i32_0 : i32, i32, i32
  }
  func.func @transform_9(%arg0: i32, %arg1: i32, %arg2: i32) -> (i32, i32) {
    %c0_i32 = arith.constant 0 : i32
    %c0_i32_0 = arith.constant 0 : i32
    %c0_i32_1 = arith.constant 0 : i32
    return %c0_i32, %c0_i32_0 : i32, i32
  }
  func.func @transform_10(%arg0: i32, %arg1: i32, %arg2: i32) -> (i32, i32, i32) {
    %c0_i32 = arith.constant 0 : i32
    %c0_i32_0 = arith.constant 0 : i32
    return %arg0, %arg1, %c0_i32 : i32, i32, i32
  }
  func.func @transform_11(%arg0: i32, %arg1: i32, %arg2: i32) -> (i32, i32, i32, i32) {
    %c0_i32 = arith.constant 0 : i32
    %c0_i32_0 = arith.constant 0 : i32
    return %arg0, %arg2, %arg1, %c0_i32 : i32, i32, i32, i32
  }
}

</mosaic_0001>

<llo_original>
// kernel: tpu_custom_call.1
$region0: #{tpu_custom_call.1}
  #allocation0 [shape = 'u32[]', space=smem, size = 0x4, offset = 0x4, fixed_abs, tag = 'smem constant byte address 0x4 - core index']
  #allocation1 [shape = 'u32[144,128]{1,0:T(1,128)}', space=vmem, size = 0x12000, scoped, tag = 'internal scratch']
  #allocation2 [shape = 'f32[64,32]{1,0:T(8,128)}', space=vmem, size = 0x8000, scoped, tag = 'scratch operand']
  %s0 = inlined_call_operand.vmem [shape: f32[2,64,32], index: 0, kind: input, shape index: {}]
  %s1 = inlined_call_operand.vmem [shape: f32[2,64,32], index: 1, kind: input, shape index: {}]
  %s2 = inlined_call_operand.vmem [shape: f32[1,32,32], index: 2, kind: input, shape index: {}]
  %s3 = inlined_call_operand.vmem [shape: f32[1,32,32], index: 3, kind: input, shape index: {}]
  %s4 = inlined_call_operand.vmem [shape: f32[1,32,32], index: 4, kind: input, shape index: {}]
  %s5 = inlined_call_operand.vmem [shape: f32[1,1,32], index: 5, kind: input, shape index: {}]
  %s6 = inlined_call_operand.vmem [shape: f32[1,1,32], index: 6, kind: input, shape index: {}]
  %s7 = inlined_call_operand.vmem [shape: f32[1,1,32], index: 7, kind: input, shape index: {}]
  %s8 = inlined_call_operand.vmem [shape: f32[1,32,32], index: 8, kind: input, shape index: {}]
  %s9 = inlined_call_operand.vmem [shape: f32[1,32], index: 9, kind: input, shape index: {}]
  %s10 = inlined_call_operand.vmem [shape: f32[2,64,32], index: 10, kind: output, shape index: {0}]
  %s11 = inlined_call_operand.hbm [shape: f32[2,2,64,64], index: 11, kind: output, shape index: {1}]
  %12 = xla_tuple %s10, %s11
  %s13 = sld [smem:[#allocation0]]
  $region89: #{tpu_custom_call.1} parent=0
    _
  %s15 = ssub.s32 1, %s13
  %s16 = scalar_select 0, %s15, %s13
  $region1: #{tpu_custom_call.1} parent=0
    #allocation3 [shape = 'u8[131072]{0}', space=vmem, size = 0x20000, scoped, tag = 'output window, operand 1']
    #allocation4 [shape = 's32[2]{0}', space=sflag, size = 0x8, scoped, tag = 'scoped memory for tpu_custom_call.1']
    %17 = vsyncpa [#allocation4], 0
    %s18 = scalar_lea.sflag [#allocation4], 1
    %19 = vsyncpa %s18, 0
    loop: start=0, step=1, limit=4
    $region2: #{tpu_custom_call.1} parent=1 // loop_pre_header
      _
    $region3: #{tpu_custom_call.1} parent=1 // loop_header
      %s21 = sphi 0, %s25
      %p22 = scmp.ge.s32.totalorder %s21, 4
      %s28 = sphi 0, %s47
      %s29 = sphi 0, %s43
      %s30 = sphi 0, %s39
      %s31 = sphi 0, %s28
      %s32 = sphi 0, %s29
      %s33 = sphi 0, %s30
      %s34 = sphi 0, %s31
      %s35 = sphi 0, %s32
      %s36 = sphi 0, %s33
      %s52 = sphi 0, %s54
      %s55 = sphi 0, %s52
      %s56 = sphi 0, %s55
      %s72 = sphi 0, %s56
      %s78 = sphi 0, %s80
      %s81 = sphi 0, %s78
      %s82 = sphi 0, %s81
      %s98 = sphi 0, %s82
      %s104 = sphi 0, %s106
      %s107 = sphi 0, %s104
      %s108 = sphi 0, %s107
      %s124 = sphi 0, %s108
      %s130 = sphi 0, %s132
      %s133 = sphi 0, %s130
      %s134 = sphi 0, %s133
      %s150 = sphi 0, %s134
      %s156 = sphi 0, %s158
      %s159 = sphi 0, %s156
      %s160 = sphi 0, %s159
      %s176 = sphi 0, %s160
      %s182 = sphi 0, %s184
      %s185 = sphi 0, %s182
      %s186 = sphi 0, %s185
      %s202 = sphi 0, %s186
      %s208 = sphi 0, %s210
      %s211 = sphi 0, %s208
      %s212 = sphi 0, %s211
      %s228 = sphi 0, %s212
      %s234 = sphi 0, %s236
      %s237 = sphi 0, %s234
      %s238 = sphi 0, %s237
      %s254 = sphi 0, %s238
      %s260 = sphi 0, %s262
      %s263 = sphi 0, %s260
      %s264 = sphi 0, %s263
      %s280 = sphi 0, %s264
      %s284 = sphi 0, %s284
      %s286 = sphi 0, %s284
      %s287 = sphi 0, %s286
      %s301 = sphi 0, %s287
      %s309 = sphi 0, %s311
      %s312 = sphi 0, %s309
      %s313 = sphi 0, %s312
      %s329 = sphi 0, %s313
      %s339 = sphi 0, %s341
      %s342 = sphi 0, %s339
      %s343 = sphi 0, %s342
      %s359 = sphi 0, %s343
    $region4: #{tpu_custom_call.1} parent=1 // loop_header_branch
      %24 = sbr.rel (%p22) target = $region8
    $region5: #{tpu_custom_call.1} parent=1 // loop_body
      %s26 = ssub.s32 %s21, 1
      %s27 = ssub.s32 %s21, 2
      %s37 = sadd.s32 1, %s30
      %p38 = scmp.ge.s32.totalorder %s37, 1
      %s39 = scalar_select %p38, 0, %s37
      %s40 = sadd.s32 1, %s29
      %s41 = scalar_select %p38, %s40, %s29
      %p42 = scmp.ge.s32.totalorder %s41, 1
      %s43 = scalar_select %p42, 0, %s41
      %s44 = sadd.s32 1, %s28
      %s45 = scalar_select %p42, %s44, %s28
      %p46 = scmp.ge.s32.totalorder %s45, 2
      %s47 = scalar_select %p46, 0, %s45
      %s48 = ssub.s32 %s28, %s47
      %s49 = ssub.s32 %s29, %s43
      %s50 = sor.u32 %s48, %s49
      %p51 = scmp.eq.s32.totalorder %s50, 0
      %s53 = sadd.s32 %s52, 1
      %s54 = scalar_select %p51, %s52, %s53
      %p57 = pneg %p51
      %p58 = scmp.eq.s32.totalorder %s21, 1
      %p59 = por %p57, %p58
      %p60 = scmp.ne.s32.totalorder %s52, %s55
      %p61 = scmp.eq.s32.totalorder %s21, 0
      %p62 = por %p60, %p61
      %p63 = scmp.ne.s32.totalorder %s52, %s55
      %p64 = scmp.eq.s32.totalorder %s26, 1
      %p65 = por %p63, %p64
      %p66 = scmp.ne.s32.totalorder %s55, %s56
      %p67 = scmp.eq.s32.totalorder %s26, 0
      %p68 = por %p66, %p67
      %p69 = scmp.ne.s32.totalorder %s55, %s56
      %p70 = scmp.eq.s32.totalorder %s27, 1
      %p71 = por %p69, %p70
      %p73 = scmp.ne.s32.totalorder %s56, %s72
      %p74 = scmp.eq.s32.totalorder %s27, 0
      %p75 = por %p73, %p74
      %s76 = ssub.s32 %s28, %s47
      %p77 = scmp.eq.s32.totalorder %s76, 0
      %s79 = sadd.s32 %s78, 1
      %s80 = scalar_select %p77, %s78, %s79
      %p83 = pneg %p77
      %p84 = scmp.eq.s32.totalorder %s21, 1
      %p85 = por %p83, %p84
      %p86 = scmp.ne.s32.totalorder %s78, %s81
      %p87 = scmp.eq.s32.totalorder %s21, 0
      %p88 = por %p86, %p87
      %p89 = scmp.ne.s32.totalorder %s78, %s81
      %p90 = scmp.eq.s32.totalorder %s26, 1
      %p91 = por %p89, %p90
      %p92 = scmp.ne.s32.totalorder %s81, %s82
      %p93 = scmp.eq.s32.totalorder %s26, 0
      %p94 = por %p92, %p93
      %p95 = scmp.ne.s32.totalorder %s81, %s82
      %p96 = scmp.eq.s32.totalorder %s27, 1
      %p97 = por %p95, %p96
      %p99 = scmp.ne.s32.totalorder %s82, %s98
      %p100 = scmp.eq.s32.totalorder %s27, 0
      %p101 = por %p99, %p100
      %s102 = ssub.s32 %s30, %s39
      %p103 = scmp.eq.s32.totalorder %s102, 0
      %s105 = sadd.s32 %s104, 1
      %s106 = scalar_select %p103, %s104, %s105
      %p109 = pneg %p103
      %p110 = scmp.eq.s32.totalorder %s21, 1
      %p111 = por %p109, %p110
      %p112 = scmp.ne.s32.totalorder %s104, %s107
      %p113 = scmp.eq.s32.totalorder %s21, 0
      %p114 = por %p112, %p113
      %p115 = scmp.ne.s32.totalorder %s104, %s107
      %p116 = scmp.eq.s32.totalorder %s26, 1
      %p117 = por %p115, %p116
      %p118 = scmp.ne.s32.totalorder %s107, %s108
      %p119 = scmp.eq.s32.totalorder %s26, 0
      %p120 = por %p118, %p119
      %p121 = scmp.ne.s32.totalorder %s107, %s108
      %p122 = scmp.eq.s32.totalorder %s27, 1
      %p123 = por %p121, %p122
      %p125 = scmp.ne.s32.totalorder %s108, %s124
      %p126 = scmp.eq.s32.totalorder %s27, 0
      %p127 = por %p125, %p126
      %s128 = ssub.s32 %s30, %s39
      %p129 = scmp.eq.s32.totalorder %s128, 0
      %s131 = sadd.s32 %s130, 1
      %s132 = scalar_select %p129, %s130, %s131
      %p135 = pneg %p129
      %p136 = scmp.eq.s32.totalorder %s21, 1
      %p137 = por %p135, %p136
      %p138 = scmp.ne.s32.totalorder %s130, %s133
      %p139 = scmp.eq.s32.totalorder %s21, 0
      %p140 = por %p138, %p139
      %p141 = scmp.ne.s32.totalorder %s130, %s133
      %p142 = scmp.eq.s32.totalorder %s26, 1
      %p143 = por %p141, %p142
      %p144 = scmp.ne.s32.totalorder %s133, %s134
      %p145 = scmp.eq.s32.totalorder %s26, 0
      %p146 = por %p144, %p145
      %p147 = scmp.ne.s32.totalorder %s133, %s134
      %p148 = scmp.eq.s32.totalorder %s27, 1
      %p149 = por %p147, %p148
      %p151 = scmp.ne.s32.totalorder %s134, %s150
      %p152 = scmp.eq.s32.totalorder %s27, 0
      %p153 = por %p151, %p152
      %s154 = ssub.s32 %s30, %s39
      %p155 = scmp.eq.s32.totalorder %s154, 0
      %s157 = sadd.s32 %s156, 1
      %s158 = scalar_select %p155, %s156, %s157
      %p161 = pneg %p155
      %p162 = scmp.eq.s32.totalorder %s21, 1
      %p163 = por %p161, %p162
      %p164 = scmp.ne.s32.totalorder %s156, %s159
      %p165 = scmp.eq.s32.totalorder %s21, 0
      %p166 = por %p164, %p165
      %p167 = scmp.ne.s32.totalorder %s156, %s159
      %p168 = scmp.eq.s32.totalorder %s26, 1
      %p169 = por %p167, %p168
      %p170 = scmp.ne.s32.totalorder %s159, %s160
      %p171 = scmp.eq.s32.totalorder %s26, 0
      %p172 = por %p170, %p171
      %p173 = scmp.ne.s32.totalorder %s159, %s160
      %p174 = scmp.eq.s32.totalorder %s27, 1
      %p175 = por %p173, %p174
      %p177 = scmp.ne.s32.totalorder %s160, %s176
      %p178 = scmp.eq.s32.totalorder %s27, 0
      %p179 = por %p177, %p178
      %s180 = ssub.s32 %s30, %s39
      %p181 = scmp.eq.s32.totalorder %s180, 0
      %s183 = sadd.s32 %s182, 1
      %s184 = scalar_select %p181, %s182, %s183
      %p187 = pneg %p181
      %p188 = scmp.eq.s32.totalorder %s21, 1
      %p189 = por %p187, %p188
      %p190 = scmp.ne.s32.totalorder %s182, %s185
      %p191 = scmp.eq.s32.totalorder %s21, 0
      %p192 = por %p190, %p191
      %p193 = scmp.ne.s32.totalorder %s182, %s185
      %p194 = scmp.eq.s32.totalorder %s26, 1
      %p195 = por %p193, %p194
      %p196 = scmp.ne.s32.totalorder %s185, %s186
      %p197 = scmp.eq.s32.totalorder %s26, 0
      %p198 = por %p196, %p197
      %p199 = scmp.ne.s32.totalorder %s185, %s186
      %p200 = scmp.eq.s32.totalorder %s27, 1
      %p201 = por %p199, %p200
      %p203 = scmp.ne.s32.totalorder %s186, %s202
      %p204 = scmp.eq.s32.totalorder %s27, 0
      %p205 = por %p203, %p204
      %s206 = ssub.s32 %s30, %s39
      %p207 = scmp.eq.s32.totalorder %s206, 0
      %s209 = sadd.s32 %s208, 1
      %s210 = scalar_select %p207, %s208, %s209
      %p213 = pneg %p207
      %p214 = scmp.eq.s32.totalorder %s21, 1
      %p215 = por %p213, %p214
      %p216 = scmp.ne.s32.totalorder %s208, %s211
      %p217 = scmp.eq.s32.totalorder %s21, 0
      %p218 = por %p216, %p217
      %p219 = scmp.ne.s32.totalorder %s208, %s211
      %p220 = scmp.eq.s32.totalorder %s26, 1
      %p221 = por %p219, %p220
      %p222 = scmp.ne.s32.totalorder %s211, %s212
      %p223 = scmp.eq.s32.totalorder %s26, 0
      %p224 = por %p222, %p223
      %p225 = scmp.ne.s32.totalorder %s211, %s212
      %p226 = scmp.eq.s32.totalorder %s27, 1
      %p227 = por %p225, %p226
      %p229 = scmp.ne.s32.totalorder %s212, %s228
      %p230 = scmp.eq.s32.totalorder %s27, 0
      %p231 = por %p229, %p230
      %s232 = ssub.s32 %s30, %s39
      %p233 = scmp.eq.s32.totalorder %s232, 0
      %s235 = sadd.s32 %s234, 1
      %s236 = scalar_select %p233, %s234, %s235
      %p239 = pneg %p233
      %p240 = scmp.eq.s32.totalorder %s21, 1
      %p241 = por %p239, %p240
      %p242 = scmp.ne.s32.totalorder %s234, %s237
      %p243 = scmp.eq.s32.totalorder %s21, 0
      %p244 = por %p242, %p243
      %p245 = scmp.ne.s32.totalorder %s234, %s237
      %p246 = scmp.eq.s32.totalorder %s26, 1
      %p247 = por %p245, %p246
      %p248 = scmp.ne.s32.totalorder %s237, %s238
      %p249 = scmp.eq.s32.totalorder %s26, 0
      %p250 = por %p248, %p249
      %p251 = scmp.ne.s32.totalorder %s237, %s238
      %p252 = scmp.eq.s32.totalorder %s27, 1
      %p253 = por %p251, %p252
      %p255 = scmp.ne.s32.totalorder %s238, %s254
      %p256 = scmp.eq.s32.totalorder %s27, 0
      %p257 = por %p255, %p256
      %s258 = ssub.s32 %s30, %s39
      %p259 = scmp.eq.s32.totalorder %s258, 0
      %s261 = sadd.s32 %s260, 1
      %s262 = scalar_select %p259, %s260, %s261
      %p265 = pneg %p259
      %p266 = scmp.eq.s32.totalorder %s21, 1
      %p267 = por %p265, %p266
      %p268 = scmp.ne.s32.totalorder %s260, %s263
      %p269 = scmp.eq.s32.totalorder %s21, 0
      %p270 = por %p268, %p269
      %p271 = scmp.ne.s32.totalorder %s260, %s263
      %p272 = scmp.eq.s32.totalorder %s26, 1
      %p273 = por %p271, %p272
      %p274 = scmp.ne.s32.totalorder %s263, %s264
      %p275 = scmp.eq.s32.totalorder %s26, 0
      %p276 = por %p274, %p275
      %p277 = scmp.ne.s32.totalorder %s263, %s264
      %p278 = scmp.eq.s32.totalorder %s27, 1
      %p279 = por %p277, %p278
      %p281 = scmp.ne.s32.totalorder %s264, %s280
      %p282 = scmp.eq.s32.totalorder %s27, 0
      %p283 = por %p281, %p282
      %s285 = sadd.s32 %s284, 1
      %p288 = scmp.eq.s32.totalorder %s21, 1
      %p289 = scmp.ne.s32.totalorder %s284, %s286
      %p290 = scmp.eq.s32.totalorder %s21, 0
      %p291 = por %p289, %p290
      %p292 = scmp.ne.s32.totalorder %s284, %s286
      %p293 = scmp.eq.s32.totalorder %s26, 1
      %p294 = por %p292, %p293
      %p295 = scmp.ne.s32.totalorder %s286, %s287
      %p296 = scmp.eq.s32.totalorder %s26, 0
      %p297 = por %p295, %p296
      %p298 = scmp.ne.s32.totalorder %s286, %s287
      %p299 = scmp.eq.s32.totalorder %s27, 1
      %p300 = por %p298, %p299
      %p302 = scmp.ne.s32.totalorder %s287, %s301
      %p303 = scmp.eq.s32.totalorder %s27, 0
      %p304 = por %p302, %p303
      %s305 = ssub.s32 %s28, %s47
      %s306 = ssub.s32 %s29, %s43
      %s307 = sor.u32 %s305, %s306
      %p308 = scmp.eq.s32.totalorder %s307, 0
      %s310 = sadd.s32 %s309, 1
      %s311 = scalar_select %p308, %s309, %s310
      %p314 = pneg %p308
      %p315 = scmp.eq.s32.totalorder %s21, 1
      %p316 = por %p314, %p315
      %p317 = scmp.ne.s32.totalorder %s309, %s312
      %p318 = scmp.eq.s32.totalorder %s21, 0
      %p319 = por %p317, %p318
      %p320 = scmp.ne.s32.totalorder %s309, %s312
      %p321 = scmp.eq.s32.totalorder %s26, 1
      %p322 = por %p320, %p321
      %p323 = scmp.ne.s32.totalorder %s312, %s313
      %p324 = scmp.eq.s32.totalorder %s26, 0
      %p325 = por %p323, %p324
      %p326 = scmp.ne.s32.totalorder %s312, %s313
      %p327 = scmp.eq.s32.totalorder %s27, 1
      %p328 = por %p326, %p327
      %p330 = scmp.ne.s32.totalorder %s313, %s329
      %p331 = scmp.eq.s32.totalorder %s27, 0
      %p332 = por %p330, %p331
      %s333 = ssub.s32 %s28, %s47
      %s334 = ssub.s32 %s30, %s39
      %s335 = sor.u32 %s333, %s334
      %s336 = ssub.s32 %s29, %s43
      %s337 = sor.u32 %s335, %s336
      %p338 = scmp.eq.s32.totalorder %s337, 0
      %s340 = sadd.s32 %s339, 1
      %s341 = scalar_select %p338, %s339, %s340
      %p344 = pneg %p338
      %p345 = scmp.eq.s32.totalorder %s21, 1
      %p346 = por %p344, %p345
      %p347 = scmp.ne.s32.totalorder %s339, %s342
      %p348 = scmp.eq.s32.totalorder %s21, 0
      %p349 = por %p347, %p348
      %p350 = scmp.ne.s32.totalorder %s339, %s342
      %p351 = scmp.eq.s32.totalorder %s26, 1
      %p352 = por %p350, %p351
      %p353 = scmp.ne.s32.totalorder %s342, %s343
      %p354 = scmp.eq.s32.totalorder %s26, 0
      %p355 = por %p353, %p354
      %p356 = scmp.ne.s32.totalorder %s342, %s343
      %p357 = scmp.eq.s32.totalorder %s27, 1
      %p358 = por %p356, %p357
      %p360 = scmp.ne.s32.totalorder %s343, %s359
      %p361 = scmp.eq.s32.totalorder %s27, 0
      %p362 = por %p360, %p361
      %p363 = scmp.le.s32.totalorder 1, %s21
      %p364 = scmp.lt.s32.totalorder %s21, 3
      %p365 = pnand %p363, %p364
      %p366 = pneg %p365
      // Predicated region
      $region9: #{tpu_custom_call.1} parent=5 // pred_check
        _
      $region10: #{tpu_custom_call.1} parent=5 // pred_check_branch
        %368 = sbr.rel (%p365) target = $region12
      $region11: #{tpu_custom_call.1} parent=5 // pred_region
        %s369 = ssub.s32 %s21, 1
        // Predicated region
        $region13: #{tpu_custom_call.1} parent=11 // pred_check
          %p370 = pneg %p120
        $region14: #{tpu_custom_call.1} parent=11 // pred_check_branch
          %372 = sbr.rel (%p370) target = $region16
        $region15: #{tpu_custom_call.1} parent=11 // pred_region
          %p373 = scmp.lt.s32.totalorder %s33, 0
          %s374 = scalar_select %p373, %s33, 0
          %s375 = smul.addr %s374, 4
          %s376 = smul.addr %s375, 8
          %s377 = scalar_lea.vmem %s2, %s376
        $region16: #{tpu_custom_call.1} parent=11 // pred_fallthru
          _
        // Predicated region
        $region17: #{tpu_custom_call.1} parent=11 // pred_check
          %p378 = pneg %p146
        $region18: #{tpu_custom_call.1} parent=11 // pred_check_branch
          %380 = sbr.rel (%p378) target = $region20
        $region19: #{tpu_custom_call.1} parent=11 // pred_region
          %p381 = scmp.lt.s32.totalorder %s33, 0
          %s382 = scalar_select %p381, %s33, 0
          %s383 = smul.addr %s382, 4
          %s384 = smul.addr %s383, 8
          %s385 = scalar_lea.vmem %s3, %s384
        $region20: #{tpu_custom_call.1} parent=11 // pred_fallthru
          _
        // Predicated region
        $region21: #{tpu_custom_call.1} parent=11 // pred_check
          %p386 = pneg %p172
        $region22: #{tpu_custom_call.1} parent=11 // pred_check_branch
          %388 = sbr.rel (%p386) target = $region24
        $region23: #{tpu_custom_call.1} parent=11 // pred_region
          %p389 = scmp.lt.s32.totalorder %s33, 0
          %s390 = scalar_select %p389, %s33, 0
          %s391 = smul.addr %s390, 4
          %s392 = smul.addr %s391, 8
          %s393 = scalar_lea.vmem %s4, %s392
        $region24: #{tpu_custom_call.1} parent=11 // pred_fallthru
          _
        // Predicated region
        $region25: #{tpu_custom_call.1} parent=11 // pred_check
          %p394 = pneg %p198
        $region26: #{tpu_custom_call.1} parent=11 // pred_check_branch
          %396 = sbr.rel (%p394) target = $region28
        $region27: #{tpu_custom_call.1} parent=11 // pred_region
          %p397 = scmp.lt.s32.totalorder %s33, 0
          %s398 = scalar_select %p397, %s33, 0
          %s399 = scalar_lea.vmem %s5, %s398
        $region28: #{tpu_custom_call.1} parent=11 // pred_fallthru
          _
        // Predicated region
        $region29: #{tpu_custom_call.1} parent=11 // pred_check
          %p400 = pneg %p224
        $region30: #{tpu_custom_call.1} parent=11 // pred_check_branch
          %402 = sbr.rel (%p400) target = $region32
        $region31: #{tpu_custom_call.1} parent=11 // pred_region
          %p403 = scmp.lt.s32.totalorder %s33, 0
          %s404 = scalar_select %p403, %s33, 0
          %s405 = scalar_lea.vmem %s6, %s404
        $region32: #{tpu_custom_call.1} parent=11 // pred_fallthru
          _
        // Predicated region
        $region33: #{tpu_custom_call.1} parent=11 // pred_check
          %p406 = pneg %p250
        $region34: #{tpu_custom_call.1} parent=11 // pred_check_branch
          %408 = sbr.rel (%p406) target = $region36
        $region35: #{tpu_custom_call.1} parent=11 // pred_region
          %p409 = scmp.lt.s32.totalorder %s33, 0
          %s410 = scalar_select %p409, %s33, 0
          %s411 = scalar_lea.vmem %s7, %s410
        $region36: #{tpu_custom_call.1} parent=11 // pred_fallthru
          _
        // Predicated region
        $region37: #{tpu_custom_call.1} parent=11 // pred_check
          %p412 = pneg %p276
        $region38: #{tpu_custom_call.1} parent=11 // pred_check_branch
          %414 = sbr.rel (%p412) target = $region40
        $region39: #{tpu_custom_call.1} parent=11 // pred_region
          %p415 = scmp.lt.s32.totalorder %s33, 0
          %s416 = scalar_select %p415, %s33, 0
          %s417 = smul.addr %s416, 4
          %s418 = smul.addr %s417, 8
          %s419 = scalar_lea.vmem %s8, %s418
        $region40: #{tpu_custom_call.1} parent=11 // pred_fallthru
          _
        // Predicated region
        $region41: #{tpu_custom_call.1} parent=11 // pred_check
          %p420 = pneg %p297
        $region42: #{tpu_custom_call.1} parent=11 // pred_check_branch
          %422 = sbr.rel (%p420) target = $region44
        $region43: #{tpu_custom_call.1} parent=11 // pred_region
          _
        $region44: #{tpu_custom_call.1} parent=11 // pred_fallthru
          _
      $region12: #{tpu_custom_call.1} parent=5 // pred_fallthru
        _
      %p423 = scmp.lt.s32.totalorder %s21, 2
      // Predicated region
      $region45: #{tpu_custom_call.1} parent=5 // pred_check
        %p424 = pneg %p423
      $region46: #{tpu_custom_call.1} parent=5 // pred_check_branch
        %426 = sbr.rel (%p424) target = $region48
      $region47: #{tpu_custom_call.1} parent=5 // pred_region
        // Predicated region
        $region49: #{tpu_custom_call.1} parent=47 // pred_check
          %p427 = pneg %p62
        $region50: #{tpu_custom_call.1} parent=47 // pred_check_branch
          %429 = sbr.rel (%p427) target = $region52
        $region51: #{tpu_custom_call.1} parent=47 // pred_region
          %s430 = smul.u32 8, %s29
          %p431 = scmp.lt.s32.totalorder %s28, 1
          %s432 = scalar_select %p431, %s28, 1
          %p433 = scmp.lt.s32.totalorder %s430, 7
          %s434 = scalar_select %p433, %s430, 7
          %s435 = smul.addr %s432, 8
          %s436 = sadd.s32 %s434, %s435
          %s437 = smul.addr %s436, 8
          %s438 = scalar_lea.vmem %s0, %s437
          %s439 = smul.u32 8, %s29
        $region52: #{tpu_custom_call.1} parent=47 // pred_fallthru
          _
        // Predicated region
        $region53: #{tpu_custom_call.1} parent=47 // pred_check
          %p440 = pneg %p88
        $region54: #{tpu_custom_call.1} parent=47 // pred_check_branch
          %442 = sbr.rel (%p440) target = $region56
        $region55: #{tpu_custom_call.1} parent=47 // pred_region
          %p443 = scmp.lt.s32.totalorder %s28, 1
          %s444 = scalar_select %p443, %s28, 1
          %s445 = smul.addr %s444, 8
          %s446 = smul.addr %s445, 8
          %s447 = scalar_lea.vmem %s1, %s446
        $region56: #{tpu_custom_call.1} parent=47 // pred_fallthru
          _
      $region48: #{tpu_custom_call.1} parent=5 // pred_fallthru
        _
      %p448 = scmp.le.s32.totalorder 1, %s21
      %p449 = scmp.lt.s32.totalorder %s21, 3
      %p450 = pnand %p448, %p449
      %p451 = pneg %p450
      // Predicated region
      $region57: #{tpu_custom_call.1} parent=5 // pred_check
        _
      $region58: #{tpu_custom_call.1} parent=5 // pred_check_branch
        %453 = sbr.rel (%p450) target = $region60
      $region59: #{tpu_custom_call.1} parent=5 // pred_region
        %s454 = ssub.s32 %s21, 1
        %s455 = smul.u32 8, %s32
        %p456 = scmp.lt.s32.totalorder %s31, 1
        %s457 = scalar_select %p456, %s31, 1
        %p458 = scmp.lt.s32.totalorder %s455, 7
        %s459 = scalar_select %p458, %s455, 7
        %s460 = smul.addr %s457, 8
        %s461 = sadd.s32 %s459, %s460
        %s462 = smul.addr %s461, 8
        %s463 = scalar_lea.vmem %s0, %s462
        %p464 = pneg %p68
        %p465 = pneg %p65
        %p466 = scmp.lt.s32.totalorder %s31, 1
        %s467 = scalar_select %p466, %s31, 1
        %s468 = smul.addr %s467, 8
        %s469 = smul.addr %s468, 8
        %s470 = scalar_lea.vmem %s1, %s469
        %p471 = pneg %p94
        %p472 = pneg %p91
        %p473 = scmp.lt.s32.totalorder %s33, 0
        %s474 = scalar_select %p473, %s33, 0
        %s475 = smul.addr %s474, 4
        %s476 = smul.addr %s475, 8
        %s477 = scalar_lea.vmem %s2, %s476
        %p478 = pneg %p120
        %p479 = pneg %p117
        %p480 = scmp.lt.s32.totalorder %s33, 0
        %s481 = scalar_select %p480, %s33, 0
        %s482 = smul.addr %s481, 4
        %s483 = smul.addr %s482, 8
        %s484 = scalar_lea.vmem %s3, %s483
        %p485 = pneg %p146
        %p486 = pneg %p143
        %p487 = scmp.lt.s32.totalorder %s33, 0
        %s488 = scalar_select %p487, %s33, 0
        %s489 = smul.addr %s488, 4
        %s490 = smul.addr %s489, 8
        %s491 = scalar_lea.vmem %s4, %s490
        %p492 = pneg %p172
        %p493 = pneg %p169
        %p494 = scmp.lt.s32.totalorder %s33, 0
        %s495 = scalar_select %p494, %s33, 0
        %s496 = scalar_lea.vmem %s5, %s495
        %p497 = pneg %p198
        %p498 = pneg %p195
        %p499 = scmp.lt.s32.totalorder %s33, 0
        %s500 = scalar_select %p499, %s33, 0
        %s501 = scalar_lea.vmem %s6, %s500
        %p502 = pneg %p224
        %p503 = pneg %p221
        %p504 = scmp.lt.s32.totalorder %s33, 0
        %s505 = scalar_select %p504, %s33, 0
        %s506 = scalar_lea.vmem %s7, %s505
        %p507 = pneg %p250
        %p508 = pneg %p247
        %p509 = scmp.lt.s32.totalorder %s33, 0
        %s510 = scalar_select %p509, %s33, 0
        %s511 = smul.addr %s510, 4
        %s512 = smul.addr %s511, 8
        %s513 = scalar_lea.vmem %s8, %s512
        %p514 = pneg %p276
        %p515 = pneg %p273
        %p516 = pneg %p297
        %p517 = pneg %p294
        %p518 = pneg %p325
        %p519 = pneg %p322
        %s520 = smul.u32 8, %s32
        %p521 = scmp.lt.s32.totalorder %s31, 1
        %s522 = scalar_select %p521, %s31, 1
        %p523 = scmp.lt.s32.totalorder %s520, 7
        %s524 = scalar_select %p523, %s520, 7
        %s525 = smul.addr %s522, 8
        %s526 = sadd.s32 %s524, %s525
        %s527 = smul.addr %s526, 8
        %s528 = scalar_lea.vmem %s10, %s527
        %p529 = pneg %p355
        %p530 = pneg %p352
        %s531 = sand.u32 %s342, 1
        %s532 = scalar_lea.sflag [#allocation4], %s531
        %s533 = sand.u32 %s342, 1
        %s534 = smul.addr %s533, 128
        %s535 = scalar_lea.vmem [#allocation3], %s534
        %s536 = smul.u32 8, %s32
        %p537 = scmp.lt.s32.totalorder %s31, 1
        %s538 = scalar_select %p537, %s31, 1
        %p539 = scmp.lt.s32.totalorder %s536, 7
        %s540 = scalar_select %p539, %s536, 7
        %s541 = smul.addr %s538, 8
        %s542 = sadd.s32 %s540, %s541
        %s543 = smul.addr %s542, 8
        %s544 = scalar_lea.vmem %s0, %s543
        %s545 = smul.u32 8, %s32
        %p546 = scmp.lt.s32.totalorder %s31, 1
        %s547 = scalar_select %p546, %s31, 1
        %s548 = smul.addr %s547, 8
        %s549 = smul.addr %s548, 8
        %s550 = scalar_lea.vmem %s1, %s549
        %p551 = scmp.lt.s32.totalorder %s33, 0
        %s552 = scalar_select %p551, %s33, 0
        %s553 = smul.addr %s552, 4
        %s554 = smul.addr %s553, 8
        %s555 = scalar_lea.vmem %s2, %s554
        %p556 = scmp.lt.s32.totalorder %s33, 0
        %s557 = scalar_select %p556, %s33, 0
        %s558 = smul.addr %s557, 4
        %s559 = smul.addr %s558, 8
        %s560 = scalar_lea.vmem %s3, %s559
        %p561 = scmp.lt.s32.totalorder %s33, 0
        %s562 = scalar_select %p561, %s33, 0
        %s563 = smul.addr %s562, 4
        %s564 = smul.addr %s563, 8
        %s565 = scalar_lea.vmem %s4, %s564
        %p566 = scmp.lt.s32.totalorder %s33, 0
        %s567 = scalar_select %p566, %s33, 0
        %s568 = scalar_lea.vmem %s5, %s567
        %p569 = scmp.lt.s32.totalorder %s33, 0
        %s570 = scalar_select %p569, %s33, 0
        %s571 = scalar_lea.vmem %s6, %s570
        %p572 = scmp.lt.s32.totalorder %s33, 0
        %s573 = scalar_select %p572, %s33, 0
        %s574 = scalar_lea.vmem %s7, %s573
        %p575 = scmp.lt.s32.totalorder %s33, 0
        %s576 = scalar_select %p575, %s33, 0
        %s577 = smul.addr %s576, 4
        %s578 = smul.addr %s577, 8
        %s579 = scalar_lea.vmem %s8, %s578
        %s580 = smul.u32 8, %s32
        %p581 = scmp.lt.s32.totalorder %s31, 1
        %s582 = scalar_select %p581, %s31, 1
        %p583 = scmp.lt.s32.totalorder %s580, 7
        %s584 = scalar_select %p583, %s580, 7
        %s585 = smul.addr %s582, 8
        %s586 = sadd.s32 %s584, %s585
        %s587 = smul.addr %s586, 8
        %s588 = scalar_lea.vmem %s10, %s587
        %s589 = smul.u32 8, %s32
        %s590 = smul.u32 2, %s33
        %s591 = smul.u32 8, %s32
        %p592 = scmp.eq.s32.totalorder %s33, 0
        // Predicated region
        $region61: #{tpu_custom_call.1} parent=59 // pred_check
          %p593 = pneg %p592
        $region62: #{tpu_custom_call.1} parent=59 // pred_check_branch
          %595 = sbr.rel (%p593) target = $region64
        $region63: #{tpu_custom_call.1} parent=59 // pred_region
          %vm596 = vcmask 261120
          %597 = vst.msk [vmem:[#allocation2] sm:$0xff] %vm596, 0.0
          %598 = vst.msk [vmem:[#allocation2 + $0x8] sm:$0xff] %vm596, 0.0
          %599 = vst.msk [vmem:[#allocation2 + $0x10] sm:$0xff] %vm596, 0.0
          %600 = vst.msk [vmem:[#allocation2 + $0x18] sm:$0xff] %vm596, 0.0
          %601 = vst.msk [vmem:[#allocation2 + $0x20] sm:$0xff] %vm596, 0.0
          %602 = vst.msk [vmem:[#allocation2 + $0x28] sm:$0xff] %vm596, 0.0
          %603 = vst.msk [vmem:[#allocation2 + $0x30] sm:$0xff] %vm596, 0.0
          %604 = vst.msk [vmem:[#allocation2 + $0x38] sm:$0xff] %vm596, 0.0
        $region64: #{tpu_custom_call.1} parent=59 // pred_fallthru
          _
        %v605 = vld [vmem:[%s544] sm:$0xff]
        %v606 = vld [vmem:[%s544 + $0x8] sm:$0xff]
        %v607 = vld [vmem:[%s544 + $0x10] sm:$0xff]
        %v608 = vld [vmem:[%s544 + $0x18] sm:$0xff]
        %v609 = vld [vmem:[%s544 + $0x20] sm:$0xff]
        %v610 = vld [vmem:[%s544 + $0x28] sm:$0xff]
        %v611 = vld [vmem:[%s544 + $0x30] sm:$0xff]
        %v612 = vld [vmem:[%s544 + $0x38] sm:$0xff]
        %v613 = vld [vmem:[%s550] sm:$0xff]
        %v614 = vld [vmem:[%s550 + $0x8] sm:$0xff]
        %v615 = vld [vmem:[%s550 + $0x10] sm:$0xff]
        %v616 = vld [vmem:[%s550 + $0x18] sm:$0xff]
        %v617 = vld [vmem:[%s550 + $0x20] sm:$0xff]
        %v618 = vld [vmem:[%s550 + $0x28] sm:$0xff]
        %v619 = vld [vmem:[%s550 + $0x30] sm:$0xff]
        %v620 = vld [vmem:[%s550 + $0x38] sm:$0xff]
        %v621 = vld [vmem:[%s555] sm:$0xff]
        %v622 = vld [vmem:[%s555 + $0x8] sm:$0xff]
        %v623 = vld [vmem:[%s555 + $0x10] sm:$0xff]
        %v624 = vld [vmem:[%s555 + $0x18] sm:$0xff]
        %v625 = vld [vmem:[%s568] sm:$0x1]
        %v627 = vlaneseq
        %v628 = vshrl.u32 %v627, 7
        %v629 = vsub.s32 0, %v628
        %v630 = vrot.slane %v625, %v629
        %vm632 = vcmask 261120
        %v634 = vsel %vm632, %v605, 0
        %v637 = vsel %vm632, %v606, 0
        %v640 = vsel %vm632, %v607, 0
        %v643 = vsel %vm632, %v608, 0
        %v646 = vsel %vm632, %v609, 0
        %v649 = vsel %vm632, %v610, 0
        %v652 = vsel %vm632, %v611, 0
        %v655 = vsel %vm632, %v612, 0
        %657 = vmatprep.subr.mxu0 0.0
        %658 = vmatpush1.msra.mxu0 0.0
        %659 = vmatprep.subr.mxu0 0.0
        %660 = vmatpush1.msra.mxu0 0.0
        %661 = vmatprep.subr.mxu0 0.0
        %662 = vmatpush1.msra.mxu0 0.0
        %663 = vmatprep.subr.mxu0 0.0
        %664 = vmatpush1.msra.mxu0 0.0
        %665 = vmatprep.subr.mxu0 0.0
        %666 = vmatpush1.msra.mxu0 0.0
        %667 = vmatprep.subr.mxu0 0.0
        %668 = vmatpush1.msra.mxu0 0.0
        %669 = vmatprep.subr.mxu0 0.0
        %670 = vmatpush1.msra.mxu0 0.0
        %671 = vmatprep.subr.mxu0 0.0
        %672 = vmatpush1.msra.mxu0 0.0
        %673 = vmatprep.subr.mxu0 0.0
        %674 = vmatpush1.msra.mxu0 0.0
        %675 = vmatprep.subr.mxu0 0.0
        %676 = vmatpush1.msra.mxu0 0.0
        %677 = vmatprep.subr.mxu0 0.0
        %678 = vmatpush1.msra.mxu0 0.0
        %679 = vmatprep.subr.mxu0 0.0
        %680 = vmatpush1.msra.mxu0 0.0
        %681 = vmatprep.subr.mxu0 0.0
        %682 = vmatpush1.msra.mxu0 %v624
        %683 = vmatprep.subr.mxu0 0.0
        %684 = vmatpush1.msra.mxu0 %v623
        %685 = vmatprep.subr.mxu0 0.0
        %686 = vmatpush1.msra.mxu0 %v622
        %687 = vmatprep.subr.mxu0 0.0
        %688 = vmatpush1.msra.mxu0 %v621
        %689 = vmatprep.subr.mxu0 0.0
        %690 = vmatpush2.msra.mxu0 0.0
        %691 = vmatprep.subr.mxu0 0.0
        %692 = vmatpush2.msra.mxu0 0.0
        %693 = vmatprep.subr.mxu0 0.0
        %694 = vmatpush2.msra.mxu0 0.0
        %695 = vmatprep.subr.mxu0 0.0
        %696 = vmatpush2.msra.mxu0 0.0
        %697 = vmatprep.subr.mxu0 0.0
        %698 = vmatpush2.msra.mxu0 0.0
        %699 = vmatprep.subr.mxu0 0.0
        %700 = vmatpush2.msra.mxu0 0.0
        %701 = vmatprep.subr.mxu0 0.0
        %702 = vmatpush2.msra.mxu0 0.0
        %703 = vmatprep.subr.mxu0 0.0
        %704 = vmatpush2.msra.mxu0 0.0
        %705 = vmatprep.subr.mxu0 0.0
        %706 = vmatpush2.msra.mxu0 0.0
        %707 = vmatprep.subr.mxu0 0.0
        %708 = vmatpush2.msra.mxu0 0.0
        %709 = vmatprep.subr.mxu0 0.0
        %710 = vmatpush2.msra.mxu0 0.0
        %711 = vmatprep.subr.mxu0 0.0
        %712 = vmatpush2.msra.mxu0 0.0
        %713 = vmatprep.subr.mxu0 0.0
        %714 = vmatpush2.msra.mxu0 0.0
        %715 = vmatprep.subr.mxu0 0.0
        %716 = vmatpush2.msra.mxu0 0.0
        %717 = vmatprep.subr.mxu0 0.0
        %718 = vmatpush2.msra.mxu0 0.0
        %719 = vmatprep.subr.mxu0 0.0
        %720 = vmatpush2.msra.mxu0 0.0
        %721 = vmatprep.mubr.f32.mxu0 0.0
        %722 = vmatmul.mubr.f32.gmra.mxu0 %v634
        %v723 = vpop.f32.mrf.mxu0
        %v724 = vadd.f32 %v630, %v723
        %v725 = vpop.f32.mrf.mxu0
        %726 = vmatprep.mubr.f32.mxu0 0.0
        %727 = vmatmul.mubr.f32.gmra.mxu0 %v637
        %v728 = vpop.f32.mrf.mxu0
        %v729 = vadd.f32 %v630, %v728
        %v730 = vpop.f32.mrf.mxu0
        %731 = vmatprep.mubr.f32.mxu0 0.0
        %732 = vmatmul.mubr.f32.gmra.mxu0 %v640
        %v733 = vpop.f32.mrf.mxu0
        %v734 = vadd.f32 %v630, %v733
        %v735 = vpop.f32.mrf.mxu0
        %736 = vmatprep.mubr.f32.mxu0 0.0
        %737 = vmatmul.mubr.f32.gmra.mxu0 %v643
        %v738 = vpop.f32.mrf.mxu0
        %v739 = vadd.f32 %v630, %v738
        %v740 = vpop.f32.mrf.mxu0
        %741 = vmatprep.mubr.f32.mxu0 0.0
        %742 = vmatmul.mubr.f32.gmra.mxu0 %v646
        %v743 = vpop.f32.mrf.mxu0
        %v744 = vadd.f32 %v630, %v743
        %v745 = vpop.f32.mrf.mxu0
        %746 = vmatprep.mubr.f32.mxu0 0.0
        %747 = vmatmul.mubr.f32.gmra.mxu0 %v649
        %v748 = vpop.f32.mrf.mxu0
        %v749 = vadd.f32 %v630, %v748
        %v750 = vpop.f32.mrf.mxu0
        %751 = vmatprep.mubr.f32.mxu0 0.0
        %752 = vmatmul.mubr.f32.gmra.mxu0 %v652
        %v753 = vpop.f32.mrf.mxu0
        %v754 = vadd.f32 %v630, %v753
        %v755 = vpop.f32.mrf.mxu0
        %756 = vmatprep.mubr.f32.mxu0 0.0
        %757 = vmatmul.mubr.f32.gmra.mxu0 %v655
        %v758 = vpop.f32.mrf.mxu0
        %v759 = vadd.f32 %v630, %v758
        %v760 = vpop.f32.mrf.mxu0
        %761 = vdwg.mxu0
        %v762 = vld [vmem:[%s560] sm:$0xff]
        %v763 = vld [vmem:[%s560 + $0x8] sm:$0xff]
        %v764 = vld [vmem:[%s560 + $0x10] sm:$0xff]
        %v765 = vld [vmem:[%s560 + $0x18] sm:$0xff]
        %v766 = vld [vmem:[%s571] sm:$0x1]
        %v768 = vlaneseq
        %v769 = vshrl.u32 %v768, 7
        %v770 = vsub.s32 0, %v769
        %v771 = vrot.slane %v766, %v770
        %v774 = vsel %vm632, %v613, 0
        %v777 = vsel %vm632, %v614, 0
        %v780 = vsel %vm632, %v615, 0
        %v783 = vsel %vm632, %v616, 0
        %v786 = vsel %vm632, %v617, 0
        %v789 = vsel %vm632, %v618, 0
        %v792 = vsel %vm632, %v619, 0
        %v795 = vsel %vm632, %v620, 0
        %797 = vmatprep.subr.mxu0 0.0
        %798 = vmatpush1.msra.mxu0 0.0
        %799 = vmatprep.subr.mxu0 0.0
        %800 = vmatpush1.msra.mxu0 0.0
        %801 = vmatprep.subr.mxu0 0.0
        %802 = vmatpush1.msra.mxu0 0.0
        %803 = vmatprep.subr.mxu0 0.0
        %804 = vmatpush1.msra.mxu0 0.0
        %805 = vmatprep.subr.mxu0 0.0
        %806 = vmatpush1.msra.mxu0 0.0
        %807 = vmatprep.subr.mxu0 0.0
        %808 = vmatpush1.msra.mxu0 0.0
        %809 = vmatprep.subr.mxu0 0.0
        %810 = vmatpush1.msra.mxu0 0.0
        %811 = vmatprep.subr.mxu0 0.0
        %812 = vmatpush1.msra.mxu0 0.0
        %813 = vmatprep.subr.mxu0 0.0
        %814 = vmatpush1.msra.mxu0 0.0
        %815 = vmatprep.subr.mxu0 0.0
        %816 = vmatpush1.msra.mxu0 0.0
        %817 = vmatprep.subr.mxu0 0.0
        %818 = vmatpush1.msra.mxu0 0.0
        %819 = vmatprep.subr.mxu0 0.0
        %820 = vmatpush1.msra.mxu0 0.0
        %821 = vmatprep.subr.mxu0 0.0
        %822 = vmatpush1.msra.mxu0 %v765
        %823 = vmatprep.subr.mxu0 0.0
        %824 = vmatpush1.msra.mxu0 %v764
        %825 = vmatprep.subr.mxu0 0.0
        %826 = vmatpush1.msra.mxu0 %v763
        %827 = vmatprep.subr.mxu0 0.0
        %828 = vmatpush1.msra.mxu0 %v762
        %829 = vmatprep.subr.mxu0 0.0
        %830 = vmatpush2.msra.mxu0 0.0
        %831 = vmatprep.subr.mxu0 0.0
        %832 = vmatpush2.msra.mxu0 0.0
        %833 = vmatprep.subr.mxu0 0.0
        %834 = vmatpush2.msra.mxu0 0.0
        %835 = vmatprep.subr.mxu0 0.0
        %836 = vmatpush2.msra.mxu0 0.0
        %837 = vmatprep.subr.mxu0 0.0
        %838 = vmatpush2.msra.mxu0 0.0
        %839 = vmatprep.subr.mxu0 0.0
        %840 = vmatpush2.msra.mxu0 0.0
        %841 = vmatprep.subr.mxu0 0.0
        %842 = vmatpush2.msra.mxu0 0.0
        %843 = vmatprep.subr.mxu0 0.0
        %844 = vmatpush2.msra.mxu0 0.0
        %845 = vmatprep.subr.mxu0 0.0
        %846 = vmatpush2.msra.mxu0 0.0
        %847 = vmatprep.subr.mxu0 0.0
        %848 = vmatpush2.msra.mxu0 0.0
        %849 = vmatprep.subr.mxu0 0.0
        %850 = vmatpush2.msra.mxu0 0.0
        %851 = vmatprep.subr.mxu0 0.0
        %852 = vmatpush2.msra.mxu0 0.0
        %853 = vmatprep.subr.mxu0 0.0
        %854 = vmatpush2.msra.mxu0 0.0
        %855 = vmatprep.subr.mxu0 0.0
        %856 = vmatpush2.msra.mxu0 0.0
        %857 = vmatprep.subr.mxu0 0.0
        %858 = vmatpush2.msra.mxu0 0.0
        %859 = vmatprep.subr.mxu0 0.0
        %860 = vmatpush2.msra.mxu0 0.0
        %861 = vmatprep.mubr.f32.mxu0 0.0
        %862 = vmatmul.mubr.f32.gmra.mxu0 %v774
        %v863 = vpop.f32.mrf.mxu0
        %v864 = vadd.f32 %v771, %v863
        %v865 = vpop.f32.mrf.mxu0
        %866 = vmatprep.mubr.f32.mxu0 0.0
        %867 = vmatmul.mubr.f32.gmra.mxu0 %v777
        %v868 = vpop.f32.mrf.mxu0
        %v869 = vadd.f32 %v771, %v868
        %v870 = vpop.f32.mrf.mxu0
        %871 = vmatprep.mubr.f32.mxu0 0.0
        %872 = vmatmul.mubr.f32.gmra.mxu0 %v780
        %v873 = vpop.f32.mrf.mxu0
        %v874 = vadd.f32 %v771, %v873
        %v875 = vpop.f32.mrf.mxu0
        %876 = vmatprep.mubr.f32.mxu0 0.0
        %877 = vmatmul.mubr.f32.gmra.mxu0 %v783
        %v878 = vpop.f32.mrf.mxu0
        %v879 = vadd.f32 %v771, %v878
        %v880 = vpop.f32.mrf.mxu0
        %881 = vmatprep.mubr.f32.mxu0 0.0
        %882 = vmatmul.mubr.f32.gmra.mxu0 %v786
        %v883 = vpop.f32.mrf.mxu0
        %v884 = vadd.f32 %v771, %v883
        %v885 = vpop.f32.mrf.mxu0
        %886 = vmatprep.mubr.f32.mxu0 0.0
        %887 = vmatmul.mubr.f32.gmra.mxu0 %v789
        %v888 = vpop.f32.mrf.mxu0
        %v889 = vadd.f32 %v771, %v888
        %v890 = vpop.f32.mrf.mxu0
        %891 = vmatprep.mubr.f32.mxu0 0.0
        %892 = vmatmul.mubr.f32.gmra.mxu0 %v792
        %v893 = vpop.f32.mrf.mxu0
        %v894 = vadd.f32 %v771, %v893
        %v895 = vpop.f32.mrf.mxu0
        %896 = vmatprep.mubr.f32.mxu0 0.0
        %897 = vmatmul.mubr.f32.gmra.mxu0 %v795
        %v898 = vpop.f32.mrf.mxu0
        %v899 = vadd.f32 %v771, %v898
        %v900 = vpop.f32.mrf.mxu0
        %901 = vdwg.mxu0
        %v902 = vld [vmem:[%s565] sm:$0xff]
        %v903 = vld [vmem:[%s565 + $0x8] sm:$0xff]
        %v904 = vld [vmem:[%s565 + $0x10] sm:$0xff]
        %v905 = vld [vmem:[%s565 + $0x18] sm:$0xff]
        %v906 = vld [vmem:[%s574] sm:$0x1]
        %v908 = vlaneseq
        %v909 = vshrl.u32 %v908, 7
        %v910 = vsub.s32 0, %v909
        %v911 = vrot.slane %v906, %v910
        %913 = vmatprep.subr.mxu0 0.0
        %914 = vmatpush1.msra.mxu0 0.0
        %915 = vmatprep.subr.mxu0 0.0
        %916 = vmatpush1.msra.mxu0 0.0
        %917 = vmatprep.subr.mxu0 0.0
        %918 = vmatpush1.msra.mxu0 0.0
        %919 = vmatprep.subr.mxu0 0.0
        %920 = vmatpush1.msra.mxu0 0.0
        %921 = vmatprep.subr.mxu0 0.0
        %922 = vmatpush1.msra.mxu0 0.0
        %923 = vmatprep.subr.mxu0 0.0
        %924 = vmatpush1.msra.mxu0 0.0
        %925 = vmatprep.subr.mxu0 0.0
        %926 = vmatpush1.msra.mxu0 0.0
        %927 = vmatprep.subr.mxu0 0.0
        %928 = vmatpush1.msra.mxu0 0.0
        %929 = vmatprep.subr.mxu0 0.0
        %930 = vmatpush1.msra.mxu0 0.0
        %931 = vmatprep.subr.mxu0 0.0
        %932 = vmatpush1.msra.mxu0 0.0
        %933 = vmatprep.subr.mxu0 0.0
        %934 = vmatpush1.msra.mxu0 0.0
        %935 = vmatprep.subr.mxu0 0.0
        %936 = vmatpush1.msra.mxu0 0.0
        %937 = vmatprep.subr.mxu0 0.0
        %938 = vmatpush1.msra.mxu0 %v905
        %939 = vmatprep.subr.mxu0 0.0
        %940 = vmatpush1.msra.mxu0 %v904
        %941 = vmatprep.subr.mxu0 0.0
        %942 = vmatpush1.msra.mxu0 %v903
        %943 = vmatprep.subr.mxu0 0.0
        %944 = vmatpush1.msra.mxu0 %v902
        %945 = vmatprep.subr.mxu0 0.0
        %946 = vmatpush2.msra.mxu0 0.0
        %947 = vmatprep.subr.mxu0 0.0
        %948 = vmatpush2.msra.mxu0 0.0
        %949 = vmatprep.subr.mxu0 0.0
        %950 = vmatpush2.msra.mxu0 0.0
        %951 = vmatprep.subr.mxu0 0.0
        %952 = vmatpush2.msra.mxu0 0.0
        %953 = vmatprep.subr.mxu0 0.0
        %954 = vmatpush2.msra.mxu0 0.0
        %955 = vmatprep.subr.mxu0 0.0
        %956 = vmatpush2.msra.mxu0 0.0
        %957 = vmatprep.subr.mxu0 0.0
        %958 = vmatpush2.msra.mxu0 0.0
        %959 = vmatprep.subr.mxu0 0.0
        %960 = vmatpush2.msra.mxu0 0.0
        %961 = vmatprep.subr.mxu0 0.0
        %962 = vmatpush2.msra.mxu0 0.0
        %963 = vmatprep.subr.mxu0 0.0
        %964 = vmatpush2.msra.mxu0 0.0
        %965 = vmatprep.subr.mxu0 0.0
        %966 = vmatpush2.msra.mxu0 0.0
        %967 = vmatprep.subr.mxu0 0.0
        %968 = vmatpush2.msra.mxu0 0.0
        %969 = vmatprep.subr.mxu0 0.0
        %970 = vmatpush2.msra.mxu0 0.0
        %971 = vmatprep.subr.mxu0 0.0
        %972 = vmatpush2.msra.mxu0 0.0
        %973 = vmatprep.subr.mxu0 0.0
        %974 = vmatpush2.msra.mxu0 0.0
        %975 = vmatprep.subr.mxu0 0.0
        %976 = vmatpush2.msra.mxu0 0.0
        %977 = vmatprep.mubr.f32.mxu0 0.0
        %978 = vmatmul.mubr.f32.gmra.mxu0 %v774
        %v979 = vpop.f32.mrf.mxu0
        %v980 = vadd.f32 %v911, %v979
        %v981 = vpop.f32.mrf.mxu0
        %982 = vmatprep.mubr.f32.mxu0 0.0
        %983 = vmatmul.mubr.f32.gmra.mxu0 %v777
        %v984 = vpop.f32.mrf.mxu0
        %v985 = vadd.f32 %v911, %v984
        %v986 = vpop.f32.mrf.mxu0
        %987 = vmatprep.mubr.f32.mxu0 0.0
        %988 = vmatmul.mubr.f32.gmra.mxu0 %v780
        %v989 = vpop.f32.mrf.mxu0
        %v990 = vadd.f32 %v911, %v989
        %v991 = vpop.f32.mrf.mxu0
        %992 = vmatprep.mubr.f32.mxu0 0.0
        %993 = vmatmul.mubr.f32.gmra.mxu0 %v783
        %v994 = vpop.f32.mrf.mxu0
        %v995 = vadd.f32 %v911, %v994
        %v996 = vpop.f32.mrf.mxu0
        %997 = vmatprep.mubr.f32.mxu0 0.0
        %998 = vmatmul.mubr.f32.gmra.mxu0 %v786
        %v999 = vpop.f32.mrf.mxu0
        %v1000 = vadd.f32 %v911, %v999
        %v1001 = vpop.f32.mrf.mxu0
        %1002 = vmatprep.mubr.f32.mxu0 0.0
        %1003 = vmatmul.mubr.f32.gmra.mxu0 %v789
        %v1004 = vpop.f32.mrf.mxu0
        %v1005 = vadd.f32 %v911, %v1004
        %v1006 = vpop.f32.mrf.mxu0
        %1007 = vmatprep.mubr.f32.mxu0 0.0
        %1008 = vmatmul.mubr.f32.gmra.mxu0 %v792
        %v1009 = vpop.f32.mrf.mxu0
        %v1010 = vadd.f32 %v911, %v1009
        %v1011 = vpop.f32.mrf.mxu0
        %1012 = vmatprep.mubr.f32.mxu0 0.0
        %1013 = vmatmul.mubr.f32.gmra.mxu0 %v795
        %v1014 = vpop.f32.mrf.mxu0
        %v1015 = vadd.f32 %v911, %v1014
        %v1016 = vpop.f32.mrf.mxu0
        %1017 = vdwg.mxu0
        %vm1018 = vcmask 130048
        %v1020 = vsel %vm1018, %v724, 0
        %v1023 = vsel %vm1018, %v729, 0
        %v1026 = vsel %vm1018, %v734, 0
        %v1029 = vsel %vm1018, %v739, 0
        %v1032 = vsel %vm1018, %v744, 0
        %v1035 = vsel %vm1018, %v749, 0
        %v1038 = vsel %vm1018, %v754, 0
        %v1041 = vsel %vm1018, %v759, 0
        %v1044 = vsel %vm1018, %v864, 0
        %v1047 = vsel %vm1018, %v869, 0
        %v1050 = vsel %vm1018, %v874, 0
        %v1053 = vsel %vm1018, %v879, 0
        %v1056 = vsel %vm1018, %v884, 0
        %v1059 = vsel %vm1018, %v889, 0
        %v1062 = vsel %vm1018, %v894, 0
        %v1065 = vsel %vm1018, %v899, 0
        %1067 = vmatprep.subr.mxu0 0.0
        %1068 = vmatpush1.xpose.msra.mxu0 0.0
        %1069 = vmatprep.subr.mxu0 0.0
        %1070 = vmatpush1.xpose.msra.mxu0 0.0
        %1071 = vmatprep.subr.mxu0 0.0
        %1072 = vmatpush1.xpose.msra.mxu0 0.0
        %1073 = vmatprep.subr.mxu0 0.0
        %1074 = vmatpush1.xpose.msra.mxu0 0.0
        %1075 = vmatprep.subr.mxu0 0.0
        %1076 = vmatpush1.xpose.msra.mxu0 0.0
        %1077 = vmatprep.subr.mxu0 0.0
        %1078 = vmatpush1.xpose.msra.mxu0 0.0
        %1079 = vmatprep.subr.mxu0 0.0
        %1080 = vmatpush1.xpose.msra.mxu0 0.0
        %1081 = vmatprep.subr.mxu0 0.0
        %1082 = vmatpush1.xpose.msra.mxu0 0.0
        %1083 = vmatprep.subr.mxu0 0.0
        %1084 = vmatpush1.xpose.msra.mxu0 %v1065
        %1085 = vmatprep.subr.mxu0 0.0
        %1086 = vmatpush1.xpose.msra.mxu0 %v1062
        %1087 = vmatprep.subr.mxu0 0.0
        %1088 = vmatpush1.xpose.msra.mxu0 %v1059
        %1089 = vmatprep.subr.mxu0 0.0
        %1090 = vmatpush1.xpose.msra.mxu0 %v1056
        %1091 = vmatprep.subr.mxu0 0.0
        %1092 = vmatpush1.xpose.msra.mxu0 %v1053
        %1093 = vmatprep.subr.mxu0 0.0
        %1094 = vmatpush1.xpose.msra.mxu0 %v1050
        %1095 = vmatprep.subr.mxu0 0.0
        %1096 = vmatpush1.xpose.msra.mxu0 %v1047
        %1097 = vmatprep.subr.mxu0 0.0
        %1098 = vmatpush1.xpose.msra.mxu0 %v1044
        %1099 = vmatprep.subr.mxu0 0.0
        %1100 = vmatpush2.xpose.msra.mxu0 0.0
        %1101 = vmatprep.subr.mxu0 0.0
        %1102 = vmatpush2.xpose.msra.mxu0 0.0
        %1103 = vmatprep.subr.mxu0 0.0
        %1104 = vmatpush2.xpose.msra.mxu0 0.0
        %1105 = vmatprep.subr.mxu0 0.0
        %1106 = vmatpush2.xpose.msra.mxu0 0.0
        %1107 = vmatprep.subr.mxu0 0.0
        %1108 = vmatpush2.xpose.msra.mxu0 0.0
        %1109 = vmatprep.subr.mxu0 0.0
        %1110 = vmatpush2.xpose.msra.mxu0 0.0
        %1111 = vmatprep.subr.mxu0 0.0
        %1112 = vmatpush2.xpose.msra.mxu0 0.0
        %1113 = vmatprep.subr.mxu0 0.0
        %1114 = vmatpush2.xpose.msra.mxu0 0.0
        %1115 = vmatprep.subr.mxu0 0.0
        %1116 = vmatpush2.xpose.msra.mxu0 0.0
        %1117 = vmatprep.subr.mxu0 0.0
        %1118 = vmatpush2.xpose.msra.mxu0 0.0
        %1119 = vmatprep.subr.mxu0 0.0
        %1120 = vmatpush2.xpose.msra.mxu0 0.0
        %1121 = vmatprep.subr.mxu0 0.0
        %1122 = vmatpush2.xpose.msra.mxu0 0.0
        %1123 = vmatprep.subr.mxu0 0.0
        %1124 = vmatpush2.xpose.msra.mxu0 0.0
        %1125 = vmatprep.subr.mxu0 0.0
        %1126 = vmatpush2.xpose.msra.mxu0 0.0
        %1127 = vmatprep.subr.mxu0 0.0
        %1128 = vmatpush2.xpose.msra.mxu0 0.0
        %1129 = vmatprep.subr.mxu0 0.0
        %1130 = vmatpush2.xpose.msra.mxu0 0.0
        %1131 = vmatprep.mubr.f32.mxu0 0.0
        %1132 = vmatmul.mubr.f32.gmra.mxu0 %v1020
        %v1133 = vpop.f32.mrf.mxu0
        %v1134 = vadd.f32 0.0, %v1133
        %v1135 = vpop.f32.mrf.mxu0
        %1136 = vmatprep.mubr.f32.mxu0 0.0
        %1137 = vmatmul.mubr.f32.gmra.mxu0 %v1023
        %v1138 = vpop.f32.mrf.mxu0
        %v1139 = vadd.f32 0.0, %v1138
        %v1140 = vpop.f32.mrf.mxu0
        %1141 = vmatprep.mubr.f32.mxu0 0.0
        %1142 = vmatmul.mubr.f32.gmra.mxu0 %v1026
        %v1143 = vpop.f32.mrf.mxu0
        %v1144 = vadd.f32 0.0, %v1143
        %v1145 = vpop.f32.mrf.mxu0
        %1146 = vmatprep.mubr.f32.mxu0 0.0
        %1147 = vmatmul.mubr.f32.gmra.mxu0 %v1029
        %v1148 = vpop.f32.mrf.mxu0
        %v1149 = vadd.f32 0.0, %v1148
        %v1150 = vpop.f32.mrf.mxu0
        %1151 = vmatprep.mubr.f32.mxu0 0.0
        %1152 = vmatmul.mubr.f32.gmra.mxu0 %v1032
        %v1153 = vpop.f32.mrf.mxu0
        %v1154 = vadd.f32 0.0, %v1153
        %v1155 = vpop.f32.mrf.mxu0
        %1156 = vmatprep.mubr.f32.mxu0 0.0
        %1157 = vmatmul.mubr.f32.gmra.mxu0 %v1035
        %v1158 = vpop.f32.mrf.mxu0
        %v1159 = vadd.f32 0.0, %v1158
        %v1160 = vpop.f32.mrf.mxu0
        %1161 = vmatprep.mubr.f32.mxu0 0.0
        %1162 = vmatmul.mubr.f32.gmra.mxu0 %v1038
        %v1163 = vpop.f32.mrf.mxu0
        %v1164 = vadd.f32 0.0, %v1163
        %v1165 = vpop.f32.mrf.mxu0
        %1166 = vmatprep.mubr.f32.mxu0 0.0
        %1167 = vmatmul.mubr.f32.gmra.mxu0 %v1041
        %v1168 = vpop.f32.mrf.mxu0
        %v1169 = vadd.f32 0.0, %v1168
        %v1170 = vpop.f32.mrf.mxu0
        %1171 = vdwg.mxu0
        %vm1172 = vcmask 523264
        %v1173 = vsel %vm1172, %v1134, -inf
        %1174 = vmax.xlane.f32.xlu0 %v1173
        %v1175 = vpop.xlane.xlu0 %1174
        %v1176 = vsel %vm1172, %v1139, -inf
        %1177 = vmax.xlane.f32.xlu0 %v1176
        %v1178 = vpop.xlane.xlu0 %1177
        %v1179 = vsel %vm1172, %v1144, -inf
        %1180 = vmax.xlane.f32.xlu0 %v1179
        %v1181 = vpop.xlane.xlu0 %1180
        %v1182 = vsel %vm1172, %v1149, -inf
        %1183 = vmax.xlane.f32.xlu0 %v1182
        %v1184 = vpop.xlane.xlu0 %1183
        %v1185 = vsel %vm1172, %v1154, -inf
        %1186 = vmax.xlane.f32.xlu0 %v1185
        %v1187 = vpop.xlane.xlu0 %1186
        %v1188 = vsel %vm1172, %v1159, -inf
        %1189 = vmax.xlane.f32.xlu0 %v1188
        %v1190 = vpop.xlane.xlu0 %1189
        %v1191 = vsel %vm1172, %v1164, -inf
        %1192 = vmax.xlane.f32.xlu0 %v1191
        %v1193 = vpop.xlane.xlu0 %1192
        %v1194 = vsel %vm1172, %v1169, -inf
        %1195 = vmax.xlane.f32.xlu0 %v1194
        %v1196 = vpop.xlane.xlu0 %1195
        %v1197 = vsub.f32 %v1134, %v1175
        %v1198 = vsub.f32 %v1139, %v1178
        %v1199 = vsub.f32 %v1144, %v1181
        %v1200 = vsub.f32 %v1149, %v1184
        %v1201 = vsub.f32 %v1154, %v1187
        %v1202 = vsub.f32 %v1159, %v1190
        %v1203 = vsub.f32 %v1164, %v1193
        %v1204 = vsub.f32 %v1169, %v1196
        %v1205 = vmul.f32 %v1197, 1.442695
        %v1206 = vpow.pop %v1205
        %v1207 = vmul.f32 %v1198, 1.442695
        %v1208 = vpow.pop %v1207
        %v1209 = vmul.f32 %v1199, 1.442695
        %v1210 = vpow.pop %v1209
        %v1211 = vmul.f32 %v1200, 1.442695
        %v1212 = vpow.pop %v1211
        %v1213 = vmul.f32 %v1201, 1.442695
        %v1214 = vpow.pop %v1213
        %v1215 = vmul.f32 %v1202, 1.442695
        %v1216 = vpow.pop %v1215
        %v1217 = vmul.f32 %v1203, 1.442695
        %v1218 = vpow.pop %v1217
        %v1219 = vmul.f32 %v1204, 1.442695
        %v1220 = vpow.pop %v1219
        %v1221 = vsel %vm1172, %v1206, 0.0
        %1222 = vadd.xlane.f32.xlu0 %v1221
        %v1223 = vpop.xlane.xlu0 %1222
        %v1224 = vsel %vm1172, %v1208, 0.0
        %1225 = vadd.xlane.f32.xlu0 %v1224
        %v1226 = vpop.xlane.xlu0 %1225
        %v1227 = vsel %vm1172, %v1210, 0.0
        %1228 = vadd.xlane.f32.xlu0 %v1227
        %v1229 = vpop.xlane.xlu0 %1228
        %v1230 = vsel %vm1172, %v1212, 0.0
        %1231 = vadd.xlane.f32.xlu0 %v1230
        %v1232 = vpop.xlane.xlu0 %1231
        %v1233 = vsel %vm1172, %v1214, 0.0
        %1234 = vadd.xlane.f32.xlu0 %v1233
        %v1235 = vpop.xlane.xlu0 %1234
        %v1236 = vsel %vm1172, %v1216, 0.0
        %1237 = vadd.xlane.f32.xlu0 %v1236
        %v1238 = vpop.xlane.xlu0 %1237
        %v1239 = vsel %vm1172, %v1218, 0.0
        %1240 = vadd.xlane.f32.xlu0 %v1239
        %v1241 = vpop.xlane.xlu0 %1240
        %v1242 = vsel %vm1172, %v1220, 0.0
        %1243 = vadd.xlane.f32.xlu0 %v1242
        %v1244 = vpop.xlane.xlu0 %1243
        %v1245 = vrcp.pop %v1223
        %v1246 = vrcp.pop %v1226
        %v1247 = vrcp.pop %v1229
        %v1248 = vrcp.pop %v1232
        %v1249 = vrcp.pop %v1235
        %v1250 = vrcp.pop %v1238
        %v1251 = vrcp.pop %v1241
        %v1252 = vrcp.pop %v1244
        %v1253 = vmul.f32 %v1206, %v1245
        %v1254 = vmul.f32 %v1208, %v1246
        %v1255 = vmul.f32 %v1210, %v1247
        %v1256 = vmul.f32 %v1212, %v1248
        %v1257 = vmul.f32 %v1214, %v1249
        %v1258 = vmul.f32 %v1216, %v1250
        %v1259 = vmul.f32 %v1218, %v1251
        %v1260 = vmul.f32 %v1220, %v1252
        %1261 = vst.msk [vmem:[%s535] sm:$0xff] %vm1172, %v1253
        %1262 = vst.msk [vmem:[%s535 + $0x8] sm:$0xff] %vm1172, %v1254
        %1263 = vst.msk [vmem:[%s535 + $0x10] sm:$0xff] %vm1172, %v1255
        %1264 = vst.msk [vmem:[%s535 + $0x18] sm:$0xff] %vm1172, %v1256
        %1265 = vst.msk [vmem:[%s535 + $0x20] sm:$0xff] %vm1172, %v1257
        %1266 = vst.msk [vmem:[%s535 + $0x28] sm:$0xff] %vm1172, %v1258
        %1267 = vst.msk [vmem:[%s535 + $0x30] sm:$0xff] %vm1172, %v1259
        %1268 = vst.msk [vmem:[%s535 + $0x38] sm:$0xff] %vm1172, %v1260
        %v1270 = vsel %vm1172, %v1253, 0
        %v1273 = vsel %vm1172, %v1254, 0
        %v1276 = vsel %vm1172, %v1255, 0
        %v1279 = vsel %vm1172, %v1256, 0
        %v1282 = vsel %vm1172, %v1257, 0
        %v1285 = vsel %vm1172, %v1258, 0
        %v1288 = vsel %vm1172, %v1259, 0
        %v1291 = vsel %vm1172, %v1260, 0
        %1293 = vmatprep.subr.mxu0 0.0
        %1294 = vmatpush1.msra.mxu0 0.0
        %1295 = vmatprep.subr.mxu0 0.0
        %1296 = vmatpush1.msra.mxu0 0.0
        %1297 = vmatprep.subr.mxu0 0.0
        %1298 = vmatpush1.msra.mxu0 0.0
        %1299 = vmatprep.subr.mxu0 0.0
        %1300 = vmatpush1.msra.mxu0 0.0
        %1301 = vmatprep.subr.mxu0 0.0
        %1302 = vmatpush1.msra.mxu0 0.0
        %1303 = vmatprep.subr.mxu0 0.0
        %1304 = vmatpush1.msra.mxu0 0.0
        %1305 = vmatprep.subr.mxu0 0.0
        %1306 = vmatpush1.msra.mxu0 0.0
        %1307 = vmatprep.subr.mxu0 0.0
        %1308 = vmatpush1.msra.mxu0 0.0
        %1309 = vmatprep.subr.mxu0 0.0
        %1310 = vmatpush1.msra.mxu0 %v1015
        %1311 = vmatprep.subr.mxu0 0.0
        %1312 = vmatpush1.msra.mxu0 %v1010
        %1313 = vmatprep.subr.mxu0 0.0
        %1314 = vmatpush1.msra.mxu0 %v1005
        %1315 = vmatprep.subr.mxu0 0.0
        %1316 = vmatpush1.msra.mxu0 %v1000
        %1317 = vmatprep.subr.mxu0 0.0
        %1318 = vmatpush1.msra.mxu0 %v995
        %1319 = vmatprep.subr.mxu0 0.0
        %1320 = vmatpush1.msra.mxu0 %v990
        %1321 = vmatprep.subr.mxu0 0.0
        %1322 = vmatpush1.msra.mxu0 %v985
        %1323 = vmatprep.subr.mxu0 0.0
        %1324 = vmatpush1.msra.mxu0 %v980
        %1325 = vmatprep.subr.mxu0 0.0
        %1326 = vmatpush2.msra.mxu0 0.0
        %1327 = vmatprep.subr.mxu0 0.0
        %1328 = vmatpush2.msra.mxu0 0.0
        %1329 = vmatprep.subr.mxu0 0.0
        %1330 = vmatpush2.msra.mxu0 0.0
        %1331 = vmatprep.subr.mxu0 0.0
        %1332 = vmatpush2.msra.mxu0 0.0
        %1333 = vmatprep.subr.mxu0 0.0
        %1334 = vmatpush2.msra.mxu0 0.0
        %1335 = vmatprep.subr.mxu0 0.0
        %1336 = vmatpush2.msra.mxu0 0.0
        %1337 = vmatprep.subr.mxu0 0.0
        %1338 = vmatpush2.msra.mxu0 0.0
        %1339 = vmatprep.subr.mxu0 0.0
        %1340 = vmatpush2.msra.mxu0 0.0
        %1341 = vmatprep.subr.mxu0 0.0
        %1342 = vmatpush2.msra.mxu0 0.0
        %1343 = vmatprep.subr.mxu0 0.0
        %1344 = vmatpush2.msra.mxu0 0.0
        %1345 = vmatprep.subr.mxu0 0.0
        %1346 = vmatpush2.msra.mxu0 0.0
        %1347 = vmatprep.subr.mxu0 0.0
        %1348 = vmatpush2.msra.mxu0 0.0
        %1349 = vmatprep.subr.mxu0 0.0
        %1350 = vmatpush2.msra.mxu0 0.0
        %1351 = vmatprep.subr.mxu0 0.0
        %1352 = vmatpush2.msra.mxu0 0.0
        %1353 = vmatprep.subr.mxu0 0.0
        %1354 = vmatpush2.msra.mxu0 0.0
        %1355 = vmatprep.subr.mxu0 0.0
        %1356 = vmatpush2.msra.mxu0 0.0
        %1357 = vmatprep.mubr.f32.mxu0 0.0
        %1358 = vmatmul.mubr.f32.gmra.mxu0 %v1270
        %v1359 = vpop.f32.mrf.mxu0
        %v1360 = vadd.f32 0.0, %v1359
        %v1361 = vpop.f32.mrf.mxu0
        %1362 = vmatprep.mubr.f32.mxu0 0.0
        %1363 = vmatmul.mubr.f32.gmra.mxu0 %v1273
        %v1364 = vpop.f32.mrf.mxu0
        %v1365 = vadd.f32 0.0, %v1364
        %v1366 = vpop.f32.mrf.mxu0
        %1367 = vmatprep.mubr.f32.mxu0 0.0
        %1368 = vmatmul.mubr.f32.gmra.mxu0 %v1276
        %v1369 = vpop.f32.mrf.mxu0
        %v1370 = vadd.f32 0.0, %v1369
        %v1371 = vpop.f32.mrf.mxu0
        %1372 = vmatprep.mubr.f32.mxu0 0.0
        %1373 = vmatmul.mubr.f32.gmra.mxu0 %v1279
        %v1374 = vpop.f32.mrf.mxu0
        %v1375 = vadd.f32 0.0, %v1374
        %v1376 = vpop.f32.mrf.mxu0
        %1377 = vmatprep.mubr.f32.mxu0 0.0
        %1378 = vmatmul.mubr.f32.gmra.mxu0 %v1282
        %v1379 = vpop.f32.mrf.mxu0
        %v1380 = vadd.f32 0.0, %v1379
        %v1381 = vpop.f32.mrf.mxu0
        %1382 = vmatprep.mubr.f32.mxu0 0.0
        %1383 = vmatmul.mubr.f32.gmra.mxu0 %v1285
        %v1384 = vpop.f32.mrf.mxu0
        %v1385 = vadd.f32 0.0, %v1384
        %v1386 = vpop.f32.mrf.mxu0
        %1387 = vmatprep.mubr.f32.mxu0 0.0
        %1388 = vmatmul.mubr.f32.gmra.mxu0 %v1288
        %v1389 = vpop.f32.mrf.mxu0
        %v1390 = vadd.f32 0.0, %v1389
        %v1391 = vpop.f32.mrf.mxu0
        %1392 = vmatprep.mubr.f32.mxu0 0.0
        %1393 = vmatmul.mubr.f32.gmra.mxu0 %v1291
        %v1394 = vpop.f32.mrf.mxu0
        %v1395 = vadd.f32 0.0, %v1394
        %v1396 = vpop.f32.mrf.mxu0
        %1397 = vdwg.mxu0
        %1398 = vrot.lane.b32.xlu0 %v724, 112
        %v1399 = vpop.permute.xlu0 %1398
        %1400 = vrot.lane.b32.xlu0 %v729, 112
        %v1401 = vpop.permute.xlu0 %1400
        %1402 = vrot.lane.b32.xlu0 %v734, 112
        %v1403 = vpop.permute.xlu0 %1402
        %1404 = vrot.lane.b32.xlu0 %v739, 112
        %v1405 = vpop.permute.xlu0 %1404
        %1406 = vrot.lane.b32.xlu0 %v744, 112
        %v1407 = vpop.permute.xlu0 %1406
        %1408 = vrot.lane.b32.xlu0 %v749, 112
        %v1409 = vpop.permute.xlu0 %1408
        %1410 = vrot.lane.b32.xlu0 %v754, 112
        %v1411 = vpop.permute.xlu0 %1410
        %1412 = vrot.lane.b32.xlu0 %v759, 112
        %v1413 = vpop.permute.xlu0 %1412
        %1414 = vrot.lane.b32.xlu0 %v864, 112
        %v1415 = vpop.permute.xlu0 %1414
        %1416 = vrot.lane.b32.xlu0 %v869, 112
        %v1417 = vpop.permute.xlu0 %1416
        %1418 = vrot.lane.b32.xlu0 %v874, 112
        %v1419 = vpop.permute.xlu0 %1418
        %1420 = vrot.lane.b32.xlu0 %v879, 112
        %v1421 = vpop.permute.xlu0 %1420
        %1422 = vrot.lane.b32.xlu0 %v884, 112
        %v1423 = vpop.permute.xlu0 %1422
        %1424 = vrot.lane.b32.xlu0 %v889, 112
        %v1425 = vpop.permute.xlu0 %1424
        %1426 = vrot.lane.b32.xlu0 %v894, 112
        %v1427 = vpop.permute.xlu0 %1426
        %1428 = vrot.lane.b32.xlu0 %v899, 112
        %v1429 = vpop.permute.xlu0 %1428
        %v1430 = vsel %vm1018, %v1399, 0
        %v1432 = vsel %vm1018, %v1401, 0
        %v1434 = vsel %vm1018, %v1403, 0
        %v1436 = vsel %vm1018, %v1405, 0
        %v1438 = vsel %vm1018, %v1407, 0
        %v1440 = vsel %vm1018, %v1409, 0
        %v1442 = vsel %vm1018, %v1411, 0
        %v1444 = vsel %vm1018, %v1413, 0
        %v1446 = vsel %vm1018, %v1415, 0
        %v1448 = vsel %vm1018, %v1417, 0
        %v1450 = vsel %vm1018, %v1419, 0
        %v1452 = vsel %vm1018, %v1421, 0
        %v1454 = vsel %vm1018, %v1423, 0
        %v1456 = vsel %vm1018, %v1425, 0
        %v1458 = vsel %vm1018, %v1427, 0
        %v1460 = vsel %vm1018, %v1429, 0
        %1462 = vmatprep.subr.mxu0 0.0
        %1463 = vmatpush1.xpose.msra.mxu0 0.0
        %1464 = vmatprep.subr.mxu0 0.0
        %1465 = vmatpush1.xpose.msra.mxu0 0.0
        %1466 = vmatprep.subr.mxu0 0.0
        %1467 = vmatpush1.xpose.msra.mxu0 0.0
        %1468 = vmatprep.subr.mxu0 0.0
        %1469 = vmatpush1.xpose.msra.mxu0 0.0
        %1470 = vmatprep.subr.mxu0 0.0
        %1471 = vmatpush1.xpose.msra.mxu0 0.0
        %1472 = vmatprep.subr.mxu0 0.0
        %1473 = vmatpush1.xpose.msra.mxu0 0.0
        %1474 = vmatprep.subr.mxu0 0.0
        %1475 = vmatpush1.xpose.msra.mxu0 0.0
        %1476 = vmatprep.subr.mxu0 0.0
        %1477 = vmatpush1.xpose.msra.mxu0 0.0
        %1478 = vmatprep.subr.mxu0 0.0
        %1479 = vmatpush1.xpose.msra.mxu0 %v1460
        %1480 = vmatprep.subr.mxu0 0.0
        %1481 = vmatpush1.xpose.msra.mxu0 %v1458
        %1482 = vmatprep.subr.mxu0 0.0
        %1483 = vmatpush1.xpose.msra.mxu0 %v1456
        %1484 = vmatprep.subr.mxu0 0.0
        %1485 = vmatpush1.xpose.msra.mxu0 %v1454
        %1486 = vmatprep.subr.mxu0 0.0
        %1487 = vmatpush1.xpose.msra.mxu0 %v1452
        %1488 = vmatprep.subr.mxu0 0.0
        %1489 = vmatpush1.xpose.msra.mxu0 %v1450
        %1490 = vmatprep.subr.mxu0 0.0
        %1491 = vmatpush1.xpose.msra.mxu0 %v1448
        %1492 = vmatprep.subr.mxu0 0.0
        %1493 = vmatpush1.xpose.msra.mxu0 %v1446
        %1494 = vmatprep.subr.mxu0 0.0
        %1495 = vmatpush2.xpose.msra.mxu0 0.0
        %1496 = vmatprep.subr.mxu0 0.0
        %1497 = vmatpush2.xpose.msra.mxu0 0.0
        %1498 = vmatprep.subr.mxu0 0.0
        %1499 = vmatpush2.xpose.msra.mxu0 0.0
        %1500 = vmatprep.subr.mxu0 0.0
        %1501 = vmatpush2.xpose.msra.mxu0 0.0
        %1502 = vmatprep.subr.mxu0 0.0
        %1503 = vmatpush2.xpose.msra.mxu0 0.0
        %1504 = vmatprep.subr.mxu0 0.0
        %1505 = vmatpush2.xpose.msra.mxu0 0.0
        %1506 = vmatprep.subr.mxu0 0.0
        %1507 = vmatpush2.xpose.msra.mxu0 0.0
        %1508 = vmatprep.subr.mxu0 0.0
        %1509 = vmatpush2.xpose.msra.mxu0 0.0
        %1510 = vmatprep.subr.mxu0 0.0
        %1511 = vmatpush2.xpose.msra.mxu0 0.0
        %1512 = vmatprep.subr.mxu0 0.0
        %1513 = vmatpush2.xpose.msra.mxu0 0.0
        %1514 = vmatprep.subr.mxu0 0.0
        %1515 = vmatpush2.xpose.msra.mxu0 0.0
        %1516 = vmatprep.subr.mxu0 0.0
        %1517 = vmatpush2.xpose.msra.mxu0 0.0
        %1518 = vmatprep.subr.mxu0 0.0
        %1519 = vmatpush2.xpose.msra.mxu0 0.0
        %1520 = vmatprep.subr.mxu0 0.0
        %1521 = vmatpush2.xpose.msra.mxu0 0.0
        %1522 = vmatprep.subr.mxu0 0.0
        %1523 = vmatpush2.xpose.msra.mxu0 0.0
        %1524 = vmatprep.subr.mxu0 0.0
        %1525 = vmatpush2.xpose.msra.mxu0 0.0
        %1526 = vmatprep.mubr.f32.mxu0 0.0
        %1527 = vmatmul.mubr.f32.gmra.mxu0 %v1430
        %v1528 = vpop.f32.mrf.mxu0
        %v1529 = vadd.f32 0.0, %v1528
        %v1530 = vpop.f32.mrf.mxu0
        %1531 = vmatprep.mubr.f32.mxu0 0.0
        %1532 = vmatmul.mubr.f32.gmra.mxu0 %v1432
        %v1533 = vpop.f32.mrf.mxu0
        %v1534 = vadd.f32 0.0, %v1533
        %v1535 = vpop.f32.mrf.mxu0
        %1536 = vmatprep.mubr.f32.mxu0 0.0
        %1537 = vmatmul.mubr.f32.gmra.mxu0 %v1434
        %v1538 = vpop.f32.mrf.mxu0
        %v1539 = vadd.f32 0.0, %v1538
        %v1540 = vpop.f32.mrf.mxu0
        %1541 = vmatprep.mubr.f32.mxu0 0.0
        %1542 = vmatmul.mubr.f32.gmra.mxu0 %v1436
        %v1543 = vpop.f32.mrf.mxu0
        %v1544 = vadd.f32 0.0, %v1543
        %v1545 = vpop.f32.mrf.mxu0
        %1546 = vmatprep.mubr.f32.mxu0 0.0
        %1547 = vmatmul.mubr.f32.gmra.mxu0 %v1438
        %v1548 = vpop.f32.mrf.mxu0
        %v1549 = vadd.f32 0.0, %v1548
        %v1550 = vpop.f32.mrf.mxu0
        %1551 = vmatprep.mubr.f32.mxu0 0.0
        %1552 = vmatmul.mubr.f32.gmra.mxu0 %v1440
        %v1553 = vpop.f32.mrf.mxu0
        %v1554 = vadd.f32 0.0, %v1553
        %v1555 = vpop.f32.mrf.mxu0
        %1556 = vmatprep.mubr.f32.mxu0 0.0
        %1557 = vmatmul.mubr.f32.gmra.mxu0 %v1442
        %v1558 = vpop.f32.mrf.mxu0
        %v1559 = vadd.f32 0.0, %v1558
        %v1560 = vpop.f32.mrf.mxu0
        %1561 = vmatprep.mubr.f32.mxu0 0.0
        %1562 = vmatmul.mubr.f32.gmra.mxu0 %v1444
        %v1563 = vpop.f32.mrf.mxu0
        %v1564 = vadd.f32 0.0, %v1563
        %v1565 = vpop.f32.mrf.mxu0
        %1566 = vdwg.mxu0
        %v1567 = vsel %vm1172, %v1529, -inf
        %1568 = vmax.xlane.f32.xlu0 %v1567
        %v1569 = vpop.xlane.xlu0 %1568
        %v1570 = vsel %vm1172, %v1534, -inf
        %1571 = vmax.xlane.f32.xlu0 %v1570
        %v1572 = vpop.xlane.xlu0 %1571
        %v1573 = vsel %vm1172, %v1539, -inf
        %1574 = vmax.xlane.f32.xlu0 %v1573
        %v1575 = vpop.xlane.xlu0 %1574
        %v1576 = vsel %vm1172, %v1544, -inf
        %1577 = vmax.xlane.f32.xlu0 %v1576
        %v1578 = vpop.xlane.xlu0 %1577
        %v1579 = vsel %vm1172, %v1549, -inf
        %1580 = vmax.xlane.f32.xlu0 %v1579
        %v1581 = vpop.xlane.xlu0 %1580
        %v1582 = vsel %vm1172, %v1554, -inf
        %1583 = vmax.xlane.f32.xlu0 %v1582
        %v1584 = vpop.xlane.xlu0 %1583
        %v1585 = vsel %vm1172, %v1559, -inf
        %1586 = vmax.xlane.f32.xlu0 %v1585
        %v1587 = vpop.xlane.xlu0 %1586
        %v1588 = vsel %vm1172, %v1564, -inf
        %1589 = vmax.xlane.f32.xlu0 %v1588
        %v1590 = vpop.xlane.xlu0 %1589
        %v1591 = vsub.f32 %v1529, %v1569
        %v1592 = vsub.f32 %v1534, %v1572
        %v1593 = vsub.f32 %v1539, %v1575
        %v1594 = vsub.f32 %v1544, %v1578
        %v1595 = vsub.f32 %v1549, %v1581
        %v1596 = vsub.f32 %v1554, %v1584
        %v1597 = vsub.f32 %v1559, %v1587
        %v1598 = vsub.f32 %v1564, %v1590
        %v1599 = vmul.f32 %v1591, 1.442695
        %v1600 = vpow.pop %v1599
        %v1601 = vmul.f32 %v1592, 1.442695
        %v1602 = vpow.pop %v1601
        %v1603 = vmul.f32 %v1593, 1.442695
        %v1604 = vpow.pop %v1603
        %v1605 = vmul.f32 %v1594, 1.442695
        %v1606 = vpow.pop %v1605
        %v1607 = vmul.f32 %v1595, 1.442695
        %v1608 = vpow.pop %v1607
        %v1609 = vmul.f32 %v1596, 1.442695
        %v1610 = vpow.pop %v1609
        %v1611 = vmul.f32 %v1597, 1.442695
        %v1612 = vpow.pop %v1611
        %v1613 = vmul.f32 %v1598, 1.442695
        %v1614 = vpow.pop %v1613
        %v1615 = vsel %vm1172, %v1600, 0.0
        %1616 = vadd.xlane.f32.xlu0 %v1615
        %v1617 = vpop.xlane.xlu0 %1616
        %v1618 = vsel %vm1172, %v1602, 0.0
        %1619 = vadd.xlane.f32.xlu0 %v1618
        %v1620 = vpop.xlane.xlu0 %1619
        %v1621 = vsel %vm1172, %v1604, 0.0
        %1622 = vadd.xlane.f32.xlu0 %v1621
        %v1623 = vpop.xlane.xlu0 %1622
        %v1624 = vsel %vm1172, %v1606, 0.0
        %1625 = vadd.xlane.f32.xlu0 %v1624
        %v1626 = vpop.xlane.xlu0 %1625
        %v1627 = vsel %vm1172, %v1608, 0.0
        %1628 = vadd.xlane.f32.xlu0 %v1627
        %v1629 = vpop.xlane.xlu0 %1628
        %v1630 = vsel %vm1172, %v1610, 0.0
        %1631 = vadd.xlane.f32.xlu0 %v1630
        %v1632 = vpop.xlane.xlu0 %1631
        %v1633 = vsel %vm1172, %v1612, 0.0
        %1634 = vadd.xlane.f32.xlu0 %v1633
        %v1635 = vpop.xlane.xlu0 %1634
        %v1636 = vsel %vm1172, %v1614, 0.0
        %1637 = vadd.xlane.f32.xlu0 %v1636
        %v1638 = vpop.xlane.xlu0 %1637
        %v1639 = vrcp.pop %v1617
        %v1640 = vrcp.pop %v1620
        %v1641 = vrcp.pop %v1623
        %v1642 = vrcp.pop %v1626
        %v1643 = vrcp.pop %v1629
        %v1644 = vrcp.pop %v1632
        %v1645 = vrcp.pop %v1635
        %v1646 = vrcp.pop %v1638
        %v1647 = vmul.f32 %v1600, %v1639
        %v1648 = vmul.f32 %v1602, %v1640
        %v1649 = vmul.f32 %v1604, %v1641
        %v1650 = vmul.f32 %v1606, %v1642
        %v1651 = vmul.f32 %v1608, %v1643
        %v1652 = vmul.f32 %v1610, %v1644
        %v1653 = vmul.f32 %v1612, %v1645
        %v1654 = vmul.f32 %v1614, %v1646
        %s1655 = scalar_lea.vmem %s535, 64 [#allocation3]
        %1656 = vst.msk [vmem:[%s1655] sm:$0xff] %vm1172, %v1647
        %1657 = vst.msk [vmem:[%s1655 + $0x8] sm:$0xff] %vm1172, %v1648
        %1658 = vst.msk [vmem:[%s1655 + $0x10] sm:$0xff] %vm1172, %v1649
        %1659 = vst.msk [vmem:[%s1655 + $0x18] sm:$0xff] %vm1172, %v1650
        %1660 = vst.msk [vmem:[%s1655 + $0x20] sm:$0xff] %vm1172, %v1651
        %1661 = vst.msk [vmem:[%s1655 + $0x28] sm:$0xff] %vm1172, %v1652
        %1662 = vst.msk [vmem:[%s1655 + $0x30] sm:$0xff] %vm1172, %v1653
        %1663 = vst.msk [vmem:[%s1655 + $0x38] sm:$0xff] %vm1172, %v1654
        %1672 = vrot.lane.b32.xlu0 %v980, 112
        %v1673 = vpop.permute.xlu0 %1672
        %1674 = vrot.lane.b32.xlu0 %v985, 112
        %v1675 = vpop.permute.xlu0 %1674
        %1676 = vrot.lane.b32.xlu0 %v990, 112
        %v1677 = vpop.permute.xlu0 %1676
        %1678 = vrot.lane.b32.xlu0 %v995, 112
        %v1679 = vpop.permute.xlu0 %1678
        %1680 = vrot.lane.b32.xlu0 %v1000, 112
        %v1681 = vpop.permute.xlu0 %1680
        %1682 = vrot.lane.b32.xlu0 %v1005, 112
        %v1683 = vpop.permute.xlu0 %1682
        %1684 = vrot.lane.b32.xlu0 %v1010, 112
        %v1685 = vpop.permute.xlu0 %1684
        %1686 = vrot.lane.b32.xlu0 %v1015, 112
        %v1687 = vpop.permute.xlu0 %1686
        %v1697 = vsel %vm1172, %v1647, 0
        %v1700 = vsel %vm1172, %v1648, 0
        %v1703 = vsel %vm1172, %v1649, 0
        %v1706 = vsel %vm1172, %v1650, 0
        %v1709 = vsel %vm1172, %v1651, 0
        %v1712 = vsel %vm1172, %v1652, 0
        %v1715 = vsel %vm1172, %v1653, 0
        %v1718 = vsel %vm1172, %v1654, 0
        %1720 = vmatprep.subr.mxu0 0.0
        %1721 = vmatpush1.msra.mxu0 0.0
        %1722 = vmatprep.subr.mxu0 0.0
        %1723 = vmatpush1.msra.mxu0 0.0
        %1724 = vmatprep.subr.mxu0 0.0
        %1725 = vmatpush1.msra.mxu0 0.0
        %1726 = vmatprep.subr.mxu0 0.0
        %1727 = vmatpush1.msra.mxu0 0.0
        %1728 = vmatprep.subr.mxu0 0.0
        %1729 = vmatpush1.msra.mxu0 0.0
        %1730 = vmatprep.subr.mxu0 0.0
        %1731 = vmatpush1.msra.mxu0 0.0
        %1732 = vmatprep.subr.mxu0 0.0
        %1733 = vmatpush1.msra.mxu0 0.0
        %1734 = vmatprep.subr.mxu0 0.0
        %1735 = vmatpush1.msra.mxu0 0.0
        %1736 = vmatprep.subr.mxu0 0.0
        %1737 = vmatpush1.msra.mxu0 %v1687
        %1738 = vmatprep.subr.mxu0 0.0
        %1739 = vmatpush1.msra.mxu0 %v1685
        %1740 = vmatprep.subr.mxu0 0.0
        %1741 = vmatpush1.msra.mxu0 %v1683
        %1742 = vmatprep.subr.mxu0 0.0
        %1743 = vmatpush1.msra.mxu0 %v1681
        %1744 = vmatprep.subr.mxu0 0.0
        %1745 = vmatpush1.msra.mxu0 %v1679
        %1746 = vmatprep.subr.mxu0 0.0
        %1747 = vmatpush1.msra.mxu0 %v1677
        %1748 = vmatprep.subr.mxu0 0.0
        %1749 = vmatpush1.msra.mxu0 %v1675
        %1750 = vmatprep.subr.mxu0 0.0
        %1751 = vmatpush1.msra.mxu0 %v1673
        %1752 = vmatprep.subr.mxu0 0.0
        %1753 = vmatpush2.msra.mxu0 0.0
        %1754 = vmatprep.subr.mxu0 0.0
        %1755 = vmatpush2.msra.mxu0 0.0
        %1756 = vmatprep.subr.mxu0 0.0
        %1757 = vmatpush2.msra.mxu0 0.0
        %1758 = vmatprep.subr.mxu0 0.0
        %1759 = vmatpush2.msra.mxu0 0.0
        %1760 = vmatprep.subr.mxu0 0.0
        %1761 = vmatpush2.msra.mxu0 0.0
        %1762 = vmatprep.subr.mxu0 0.0
        %1763 = vmatpush2.msra.mxu0 0.0
        %1764 = vmatprep.subr.mxu0 0.0
        %1765 = vmatpush2.msra.mxu0 0.0
        %1766 = vmatprep.subr.mxu0 0.0
        %1767 = vmatpush2.msra.mxu0 0.0
        %1768 = vmatprep.subr.mxu0 0.0
        %1769 = vmatpush2.msra.mxu0 0.0
        %1770 = vmatprep.subr.mxu0 0.0
        %1771 = vmatpush2.msra.mxu0 0.0
        %1772 = vmatprep.subr.mxu0 0.0
        %1773 = vmatpush2.msra.mxu0 0.0
        %1774 = vmatprep.subr.mxu0 0.0
        %1775 = vmatpush2.msra.mxu0 0.0
        %1776 = vmatprep.subr.mxu0 0.0
        %1777 = vmatpush2.msra.mxu0 0.0
        %1778 = vmatprep.subr.mxu0 0.0
        %1779 = vmatpush2.msra.mxu0 0.0
        %1780 = vmatprep.subr.mxu0 0.0
        %1781 = vmatpush2.msra.mxu0 0.0
        %1782 = vmatprep.subr.mxu0 0.0
        %1783 = vmatpush2.msra.mxu0 0.0
        %1784 = vmatprep.mubr.f32.mxu0 0.0
        %1785 = vmatmul.mubr.f32.gmra.mxu0 %v1697
        %v1786 = vpop.f32.mrf.mxu0
        %v1787 = vadd.f32 0.0, %v1786
        %v1788 = vpop.f32.mrf.mxu0
        %1789 = vmatprep.mubr.f32.mxu0 0.0
        %1790 = vmatmul.mubr.f32.gmra.mxu0 %v1700
        %v1791 = vpop.f32.mrf.mxu0
        %v1792 = vadd.f32 0.0, %v1791
        %v1793 = vpop.f32.mrf.mxu0
        %1794 = vmatprep.mubr.f32.mxu0 0.0
        %1795 = vmatmul.mubr.f32.gmra.mxu0 %v1703
        %v1796 = vpop.f32.mrf.mxu0
        %v1797 = vadd.f32 0.0, %v1796
        %v1798 = vpop.f32.mrf.mxu0
        %1799 = vmatprep.mubr.f32.mxu0 0.0
        %1800 = vmatmul.mubr.f32.gmra.mxu0 %v1706
        %v1801 = vpop.f32.mrf.mxu0
        %v1802 = vadd.f32 0.0, %v1801
        %v1803 = vpop.f32.mrf.mxu0
        %1804 = vmatprep.mubr.f32.mxu0 0.0
        %1805 = vmatmul.mubr.f32.gmra.mxu0 %v1709
        %v1806 = vpop.f32.mrf.mxu0
        %v1807 = vadd.f32 0.0, %v1806
        %v1808 = vpop.f32.mrf.mxu0
        %1809 = vmatprep.mubr.f32.mxu0 0.0
        %1810 = vmatmul.mubr.f32.gmra.mxu0 %v1712
        %v1811 = vpop.f32.mrf.mxu0
        %v1812 = vadd.f32 0.0, %v1811
        %v1813 = vpop.f32.mrf.mxu0
        %1814 = vmatprep.mubr.f32.mxu0 0.0
        %1815 = vmatmul.mubr.f32.gmra.mxu0 %v1715
        %v1816 = vpop.f32.mrf.mxu0
        %v1817 = vadd.f32 0.0, %v1816
        %v1818 = vpop.f32.mrf.mxu0
        %1819 = vmatprep.mubr.f32.mxu0 0.0
        %1820 = vmatmul.mubr.f32.gmra.mxu0 %v1718
        %v1821 = vpop.f32.mrf.mxu0
        %v1822 = vadd.f32 0.0, %v1821
        %v1823 = vpop.f32.mrf.mxu0
        %1824 = vdwg.mxu0
        %1833 = vrot.lane.b32.xlu0 %v1787, 16
        %v1834 = vpop.permute.xlu0 %1833
        %1835 = vrot.lane.b32.xlu0 %v1792, 16
        %v1836 = vpop.permute.xlu0 %1835
        %1837 = vrot.lane.b32.xlu0 %v1797, 16
        %v1838 = vpop.permute.xlu0 %1837
        %1839 = vrot.lane.b32.xlu0 %v1802, 16
        %v1840 = vpop.permute.xlu0 %1839
        %1841 = vrot.lane.b32.xlu0 %v1807, 16
        %v1842 = vpop.permute.xlu0 %1841
        %1843 = vrot.lane.b32.xlu0 %v1812, 16
        %v1844 = vpop.permute.xlu0 %1843
        %1845 = vrot.lane.b32.xlu0 %v1817, 16
        %v1846 = vpop.permute.xlu0 %1845
        %1847 = vrot.lane.b32.xlu0 %v1822, 16
        %v1848 = vpop.permute.xlu0 %1847
        %v1857 = vsel %vm1018, %v1360, %v1834
        %v1858 = vsel %vm1018, %v1365, %v1836
        %v1859 = vsel %vm1018, %v1370, %v1838
        %v1860 = vsel %vm1018, %v1375, %v1840
        %v1861 = vsel %vm1018, %v1380, %v1842
        %v1862 = vsel %vm1018, %v1385, %v1844
        %v1863 = vsel %vm1018, %v1390, %v1846
        %v1864 = vsel %vm1018, %v1395, %v1848
        %v1865 = vld [vmem:[%s579] sm:$0xff]
        %v1866 = vld [vmem:[%s579 + $0x8] sm:$0xff]
        %v1867 = vld [vmem:[%s579 + $0x10] sm:$0xff]
        %v1868 = vld [vmem:[%s579 + $0x18] sm:$0xff]
        %v1869 = vld [vmem:[#allocation2] sm:$0xff]
        %v1870 = vld [vmem:[#allocation2 + $0x8] sm:$0xff]
        %v1871 = vld [vmem:[#allocation2 + $0x10] sm:$0xff]
        %v1872 = vld [vmem:[#allocation2 + $0x18] sm:$0xff]
        %v1873 = vld [vmem:[#allocation2 + $0x20] sm:$0xff]
        %v1874 = vld [vmem:[#allocation2 + $0x28] sm:$0xff]
        %v1875 = vld [vmem:[#allocation2 + $0x30] sm:$0xff]
        %v1876 = vld [vmem:[#allocation2 + $0x38] sm:$0xff]
        %v1878 = vsel %vm632, %v1857, 0
        %v1881 = vsel %vm632, %v1858, 0
        %v1884 = vsel %vm632, %v1859, 0
        %v1887 = vsel %vm632, %v1860, 0
        %v1890 = vsel %vm632, %v1861, 0
        %v1893 = vsel %vm632, %v1862, 0
        %v1896 = vsel %vm632, %v1863, 0
        %v1899 = vsel %vm632, %v1864, 0
        %1901 = vmatprep.subr.mxu0 0.0
        %1902 = vmatpush1.msra.mxu0 0.0
        %1903 = vmatprep.subr.mxu0 0.0
        %1904 = vmatpush1.msra.mxu0 0.0
        %1905 = vmatprep.subr.mxu0 0.0
        %1906 = vmatpush1.msra.mxu0 0.0
        %1907 = vmatprep.subr.mxu0 0.0
        %1908 = vmatpush1.msra.mxu0 0.0
        %1909 = vmatprep.subr.mxu0 0.0
        %1910 = vmatpush1.msra.mxu0 0.0
        %1911 = vmatprep.subr.mxu0 0.0
        %1912 = vmatpush1.msra.mxu0 0.0
        %1913 = vmatprep.subr.mxu0 0.0
        %1914 = vmatpush1.msra.mxu0 0.0
        %1915 = vmatprep.subr.mxu0 0.0
        %1916 = vmatpush1.msra.mxu0 0.0
        %1917 = vmatprep.subr.mxu0 0.0
        %1918 = vmatpush1.msra.mxu0 0.0
        %1919 = vmatprep.subr.mxu0 0.0
        %1920 = vmatpush1.msra.mxu0 0.0
        %1921 = vmatprep.subr.mxu0 0.0
        %1922 = vmatpush1.msra.mxu0 0.0
        %1923 = vmatprep.subr.mxu0 0.0
        %1924 = vmatpush1.msra.mxu0 0.0
        %1925 = vmatprep.subr.mxu0 0.0
        %1926 = vmatpush1.msra.mxu0 %v1868
        %1927 = vmatprep.subr.mxu0 0.0
        %1928 = vmatpush1.msra.mxu0 %v1867
        %1929 = vmatprep.subr.mxu0 0.0
        %1930 = vmatpush1.msra.mxu0 %v1866
        %1931 = vmatprep.subr.mxu0 0.0
        %1932 = vmatpush1.msra.mxu0 %v1865
        %1933 = vmatprep.subr.mxu0 0.0
        %1934 = vmatpush2.msra.mxu0 0.0
        %1935 = vmatprep.subr.mxu0 0.0
        %1936 = vmatpush2.msra.mxu0 0.0
        %1937 = vmatprep.subr.mxu0 0.0
        %1938 = vmatpush2.msra.mxu0 0.0
        %1939 = vmatprep.subr.mxu0 0.0
        %1940 = vmatpush2.msra.mxu0 0.0
        %1941 = vmatprep.subr.mxu0 0.0
        %1942 = vmatpush2.msra.mxu0 0.0
        %1943 = vmatprep.subr.mxu0 0.0
        %1944 = vmatpush2.msra.mxu0 0.0
        %1945 = vmatprep.subr.mxu0 0.0
        %1946 = vmatpush2.msra.mxu0 0.0
        %1947 = vmatprep.subr.mxu0 0.0
        %1948 = vmatpush2.msra.mxu0 0.0
        %1949 = vmatprep.subr.mxu0 0.0
        %1950 = vmatpush2.msra.mxu0 0.0
        %1951 = vmatprep.subr.mxu0 0.0
        %1952 = vmatpush2.msra.mxu0 0.0
        %1953 = vmatprep.subr.mxu0 0.0
        %1954 = vmatpush2.msra.mxu0 0.0
        %1955 = vmatprep.subr.mxu0 0.0
        %1956 = vmatpush2.msra.mxu0 0.0
        %1957 = vmatprep.subr.mxu0 0.0
        %1958 = vmatpush2.msra.mxu0 0.0
        %1959 = vmatprep.subr.mxu0 0.0
        %1960 = vmatpush2.msra.mxu0 0.0
        %1961 = vmatprep.subr.mxu0 0.0
        %1962 = vmatpush2.msra.mxu0 0.0
        %1963 = vmatprep.subr.mxu0 0.0
        %1964 = vmatpush2.msra.mxu0 0.0
        %1965 = vmatprep.mubr.f32.mxu0 0.0
        %1966 = vmatmul.mubr.f32.gmra.mxu0 %v1878
        %v1967 = vpop.f32.mrf.mxu0
        %v1968 = vadd.f32 0.0, %v1967
        %v1969 = vpop.f32.mrf.mxu0
        %1970 = vmatprep.mubr.f32.mxu0 0.0
        %1971 = vmatmul.mubr.f32.gmra.mxu0 %v1881
        %v1972 = vpop.f32.mrf.mxu0
        %v1973 = vadd.f32 0.0, %v1972
        %v1974 = vpop.f32.mrf.mxu0
        %1975 = vmatprep.mubr.f32.mxu0 0.0
        %1976 = vmatmul.mubr.f32.gmra.mxu0 %v1884
        %v1977 = vpop.f32.mrf.mxu0
        %v1978 = vadd.f32 0.0, %v1977
        %v1979 = vpop.f32.mrf.mxu0
        %1980 = vmatprep.mubr.f32.mxu0 0.0
        %1981 = vmatmul.mubr.f32.gmra.mxu0 %v1887
        %v1982 = vpop.f32.mrf.mxu0
        %v1983 = vadd.f32 0.0, %v1982
        %v1984 = vpop.f32.mrf.mxu0
        %1985 = vmatprep.mubr.f32.mxu0 0.0
        %1986 = vmatmul.mubr.f32.gmra.mxu0 %v1890
        %v1987 = vpop.f32.mrf.mxu0
        %v1988 = vadd.f32 0.0, %v1987
        %v1989 = vpop.f32.mrf.mxu0
        %1990 = vmatprep.mubr.f32.mxu0 0.0
        %1991 = vmatmul.mubr.f32.gmra.mxu0 %v1893
        %v1992 = vpop.f32.mrf.mxu0
        %v1993 = vadd.f32 0.0, %v1992
        %v1994 = vpop.f32.mrf.mxu0
        %1995 = vmatprep.mubr.f32.mxu0 0.0
        %1996 = vmatmul.mubr.f32.gmra.mxu0 %v1896
        %v1997 = vpop.f32.mrf.mxu0
        %v1998 = vadd.f32 0.0, %v1997
        %v1999 = vpop.f32.mrf.mxu0
        %2000 = vmatprep.mubr.f32.mxu0 0.0
        %2001 = vmatmul.mubr.f32.gmra.mxu0 %v1899
        %v2002 = vpop.f32.mrf.mxu0
        %v2003 = vadd.f32 0.0, %v2002
        %v2004 = vpop.f32.mrf.mxu0
        %2005 = vdwg.mxu0
        %v2006 = vadd.f32 %v1869, %v1968
        %v2007 = vadd.f32 %v1870, %v1973
        %v2008 = vadd.f32 %v1871, %v1978
        %v2009 = vadd.f32 %v1872, %v1983
        %v2010 = vadd.f32 %v1873, %v1988
        %v2011 = vadd.f32 %v1874, %v1993
        %v2012 = vadd.f32 %v1875, %v1998
        %v2013 = vadd.f32 %v1876, %v2003
        %2014 = vst.msk [vmem:[#allocation2] sm:$0xff] %vm632, %v2006
        %2015 = vst.msk [vmem:[#allocation2 + $0x8] sm:$0xff] %vm632, %v2007
        %2016 = vst.msk [vmem:[#allocation2 + $0x10] sm:$0xff] %vm632, %v2008
        %2017 = vst.msk [vmem:[#allocation2 + $0x18] sm:$0xff] %vm632, %v2009
        %2018 = vst.msk [vmem:[#allocation2 + $0x20] sm:$0xff] %vm632, %v2010
        %2019 = vst.msk [vmem:[#allocation2 + $0x28] sm:$0xff] %vm632, %v2011
        %2020 = vst.msk [vmem:[#allocation2 + $0x30] sm:$0xff] %vm632, %v2012
        %2021 = vst.msk [vmem:[#allocation2 + $0x38] sm:$0xff] %vm632, %v2013
        // Predicated region
        $region65: #{tpu_custom_call.1} parent=59 // pred_check
          %p2022 = pneg %p592
        $region66: #{tpu_custom_call.1} parent=59 // pred_check_branch
          %2024 = sbr.rel (%p2022) target = $region68
        $region67: #{tpu_custom_call.1} parent=59 // pred_region
          %v2025 = vld [vmem:[#allocation2] sm:$0xff]
          %v2026 = vld [vmem:[#allocation2 + $0x8] sm:$0xff]
          %v2027 = vld [vmem:[#allocation2 + $0x10] sm:$0xff]
          %v2028 = vld [vmem:[#allocation2 + $0x18] sm:$0xff]
          %v2029 = vld [vmem:[#allocation2 + $0x20] sm:$0xff]
          %v2030 = vld [vmem:[#allocation2 + $0x28] sm:$0xff]
          %v2031 = vld [vmem:[#allocation2 + $0x30] sm:$0xff]
          %v2032 = vld [vmem:[#allocation2 + $0x38] sm:$0xff]
          %v2033 = vld [vmem:[%s9] sm:$0x1]
          %v2035 = vlaneseq
          %v2036 = vshrl.u32 %v2035, 7
          %v2037 = vsub.s32 0, %v2036
          %v2038 = vrot.slane %v2033, %v2037
          %v2040 = vadd.f32 %v2025, %v2038
          %v2041 = vadd.f32 %v2026, %v2038
          %v2042 = vadd.f32 %v2027, %v2038
          %v2043 = vadd.f32 %v2028, %v2038
          %v2044 = vadd.f32 %v2029, %v2038
          %v2045 = vadd.f32 %v2030, %v2038
          %v2046 = vadd.f32 %v2031, %v2038
          %v2047 = vadd.f32 %v2032, %v2038
          %2048 = vst.msk [vmem:[%s588] sm:$0xff] %vm632, %v2040
          %2049 = vst.msk [vmem:[%s588 + $0x8] sm:$0xff] %vm632, %v2041
          %2050 = vst.msk [vmem:[%s588 + $0x10] sm:$0xff] %vm632, %v2042
          %2051 = vst.msk [vmem:[%s588 + $0x18] sm:$0xff] %vm632, %v2043
          %2052 = vst.msk [vmem:[%s588 + $0x20] sm:$0xff] %vm632, %v2044
          %2053 = vst.msk [vmem:[%s588 + $0x28] sm:$0xff] %vm632, %v2045
          %2054 = vst.msk [vmem:[%s588 + $0x30] sm:$0xff] %vm632, %v2046
          %2055 = vst.msk [vmem:[%s588 + $0x38] sm:$0xff] %vm632, %v2047
        $region68: #{tpu_custom_call.1} parent=59 // pred_fallthru
          _
        %s2056 = smul.u32 8, %s32
        %p2057 = scmp.lt.s32.totalorder %s31, 1
        %s2058 = scalar_select %p2057, %s31, 1
        %p2059 = scmp.lt.s32.totalorder %s2056, 7
        %s2060 = scalar_select %p2059, %s2056, 7
        %s2061 = smul.addr %s2058, 8
        %s2062 = sadd.s32 %s2060, %s2061
        %s2063 = smul.addr %s2062, 8
        %s2064 = scalar_lea.vmem %s10, %s2063
        %s2065 = sand.u32 %s342, 1
        %s2066 = scalar_lea.sflag [#allocation4], %s2065
        %s2067 = sand.u32 %s342, 1
        %s2068 = smul.addr %s2067, 128
        %s2069 = scalar_lea.vmem [#allocation3], %s2068
        // Predicated region
        $region69: #{tpu_custom_call.1} parent=59 // pred_check
          %p2070 = pneg %p322
        $region70: #{tpu_custom_call.1} parent=59 // pred_check_branch
          %2072 = sbr.rel (%p2070) target = $region72
        $region71: #{tpu_custom_call.1} parent=59 // pred_region
          %s2073 = smul.u32 8, %s32
        $region72: #{tpu_custom_call.1} parent=59 // pred_fallthru
          _
        // Predicated region
        $region73: #{tpu_custom_call.1} parent=59 // pred_check
          %p2074 = pneg %p352
        $region74: #{tpu_custom_call.1} parent=59 // pred_check_branch
          %2076 = sbr.rel (%p2074) target = $region76
        $region75: #{tpu_custom_call.1} parent=59 // pred_region
          %s2077 = smul.u32 2, %s33
          %s2078 = smul.u32 8, %s32
          %s2080 = ssub.s32 2048, 2048
          %2081 = vsyncadd %s2066, %s2080
          %s2082 = smul.addr %s2077, 8
          %s2083 = sadd.s32 %s2078, %s2082
          %s2084 = smul.addr %s31, 16
          %s2085 = sadd.s32 %s2083, %s2084
          %s2086 = smul.addr %s2085, 128
          %s2087 = scalar_lea.hbm %s11, %s2086
          %s2088 = sshll.u32 %s2069, 4
          %s2089 = int_to_ptr.vmem [resolvable:$true] %s2088
          %2094 = dma.vmem_to_hbm [thread:$0]  %s2089, 2048, %s2087, %s2066, 128, 128, 8
        $region76: #{tpu_custom_call.1} parent=59 // pred_fallthru
          _
      $region60: #{tpu_custom_call.1} parent=5 // pred_fallthru
        _
      %p2095 = scmp.le.s32.totalorder 2, %s21
      // Predicated region
      $region77: #{tpu_custom_call.1} parent=5 // pred_check
        %p2096 = pneg %p2095
      $region78: #{tpu_custom_call.1} parent=5 // pred_check_branch
        %2098 = sbr.rel (%p2096) target = $region80
      $region79: #{tpu_custom_call.1} parent=5 // pred_region
        %s2099 = ssub.s32 %s21, 2
        // Predicated region
        $region81: #{tpu_custom_call.1} parent=79 // pred_check
          %p2100 = pneg %p328
        $region82: #{tpu_custom_call.1} parent=79 // pred_check_branch
          %2102 = sbr.rel (%p2100) target = $region84
        $region83: #{tpu_custom_call.1} parent=79 // pred_region
          %s2103 = smul.u32 8, %s35
          %p2104 = scmp.lt.s32.totalorder %s34, 1
          %s2105 = scalar_select %p2104, %s34, 1
          %p2106 = scmp.lt.s32.totalorder %s2103, 7
          %s2107 = scalar_select %p2106, %s2103, 7
          %s2108 = smul.addr %s2105, 8
          %s2109 = sadd.s32 %s2107, %s2108
          %s2110 = smul.addr %s2109, 8
          %s2111 = scalar_lea.vmem %s10, %s2110
        $region84: #{tpu_custom_call.1} parent=79 // pred_fallthru
          _
        // Predicated region
        $region85: #{tpu_custom_call.1} parent=79 // pred_check
          %p2112 = pneg %p358
        $region86: #{tpu_custom_call.1} parent=79 // pred_check_branch
          %2114 = sbr.rel (%p2112) target = $region88
        $region87: #{tpu_custom_call.1} parent=79 // pred_region
          %s2115 = sand.u32 %s343, 1
          %s2116 = scalar_lea.sflag [#allocation4], %s2115
          %s2117 = sand.u32 %s343, 1
          %s2118 = smul.addr %s2117, 128
          %s2119 = scalar_lea.vmem [#allocation3], %s2118
          %2120 = dma.done %s2116, 2048
        $region88: #{tpu_custom_call.1} parent=79 // pred_fallthru
          _
      $region80: #{tpu_custom_call.1} parent=5 // pred_fallthru
        _
    $region6: #{tpu_custom_call.1} parent=1 // loop_footer
      %s25 = sadd.s32 1, %s21
    $region7: #{tpu_custom_call.1} parent=1 // loop_footer_branch
      %20 = sbr.rel target = $region3
    $region8: #{tpu_custom_call.1} parent=1 // loop_exit
      _
    %2121 = vsyncpa [#allocation4], 1
    %s2122 = scalar_lea.sflag [#allocation4], 1
    %2123 = vsyncpa %s2122, 1

</llo_original>
